<compile_context>
chip_gen: v7x
topology: tpu7x:2x2x1
jax: 0.10.0
libtpu: 0.0.40
codegen_flags: <defaults>
</compile_context>

<pallas_src>
import functools

import numpy as np

import jax
import jax.numpy as jnp
from jax.experimental import pallas as pl
from jax.experimental.pallas import tpu as pltpu


def _round_up(n, m):
    return ((n + m - 1) // m) * m


def _pick_tb(batch):
    """Batch tile: big enough to amortize per-step overhead, grid >= 2."""
    bp = _round_up(batch, 8)
    if bp <= 16:
        return 8
    # Keep at least two grid steps (v7x megacore) and cap at 128 so the f32
    # intermediates stay far inside v7x's 64 MiB VMEM.  v6e can take larger
    # tiles; pass tb= explicitly to sweep 64/128/256.
    return int(min(128, _round_up(bp // 2, 8)))


# ----------------------------------------------------------------------------
# The single fused kernel
# ----------------------------------------------------------------------------
def fused_cnn_kernel(x_ref, m1_ref, b1_ref, m2_ref, b2_ref,
                     w1h_ref, bf1_ref, wf2_ref, bf2_ref, wf3_ref, bf3_ref,
                     out_ref):
    f32, bf16 = jnp.float32, jnp.bfloat16
    dot = functools.partial(jnp.dot, preferred_element_type=f32)
    tb = x_ref.shape[1]                                # batch tile (multiple of 8)

    # Input tile: rows = (h, b), lanes = w.  One bf16 cast for the MXU fast path.
    x = x_ref[...].astype(bf16)                        # (28, tb, 28)

    # ---- conv1 (5x5, 1->6): 5 band-matrix matmuls over W, + bias + ReLU ----
    # acc1 rows = (h1, b); cols (parity-major) = (w1 % 2)*128 + (w1 // 2)*6 + oc
    acc1 = dot(x[0:24].reshape(24 * tb, 28), m1_ref[0])
    for ki in range(1, 5):
        acc1 = acc1 + dot(x[ki:ki + 24].reshape(24 * tb, 28), m1_ref[ki])
    acc1 = jnp.maximum(acc1 + b1_ref[...], 0.0)        # (24*tb, 256) f32

    # ---- 2x2 max pool #1 ----
    # H pairs: 8-aligned sublane slices.  W pairs: parity-major lane halves
    # (vreg-aligned 128-lane slices), pure VPU max — no selection matmuls.
    a = acc1.reshape(12, 2 * tb, 256)
    hmax = jnp.maximum(a[:, :tb, :], a[:, tb:, :]).reshape(12 * tb, 256)
    p1 = jnp.maximum(hmax[:, :128], hmax[:, 128:]).astype(bf16)   # (12*tb, 128)
    # p1 cols = w*6 + oc  (w<12, oc<6); lanes 72..127 are zero.

    # ---- conv2 (5x5, 6->16): 5 band-matrix matmuls, + bias + ReLU ----
    # acc2 rows = (h2, b); cols (parity-major) = (w2 % 2)*64 + (w2 // 2)*16 + oc
    p1_3d = p1.reshape(12, tb, 128)
    acc2 = dot(p1_3d[0:8].reshape(8 * tb, 128), m2_ref[0])
    for ki in range(1, 5):
        acc2 = acc2 + dot(p1_3d[ki:ki + 8].reshape(8 * tb, 128), m2_ref[ki])
    acc2 = jnp.maximum(acc2 + b2_ref[...], 0.0)        # (8*tb, 128) f32

    # ---- 2x2 max pool #2 (same trick; 64-lane halves) ----
    a2 = acc2.reshape(4, 2 * tb, 128)
    hmax2 = jnp.maximum(a2[:, :tb, :], a2[:, tb:, :]).reshape(4 * tb, 128)
    p2 = jnp.maximum(hmax2[:, :64], hmax2[:, 64:]).astype(bf16)   # (4*tb, 64)
    # p2 cols = w*16 + oc (w<4, oc<16) — matches the original layout.

    # ---- flatten (torch NCHW order folded into fc1) + fc1 + ReLU ----
    p2_3d = p2.reshape(4, tb, 64)
    z = bf1_ref[...] + dot(p2_3d[0], w1h_ref[0])
    for h in range(1, 4):
        z = z + dot(p2_3d[h], w1h_ref[h])
    z = jnp.maximum(z, 0.0).astype(bf16)               # (tb, 120)

    # ---- fc2 + ReLU, fc3 (padded to 64 output lanes) ----
    z = jnp.maximum(dot(z, wf2_ref[...]) + bf2_ref[...], 0.0).astype(bf16)
    out_ref[...] = (dot(z, wf3_ref[...]) + bf3_ref[...]).astype(out_ref.dtype)


# ----------------------------------------------------------------------------
# Parameter init (torch layouts) + one-time host-side packing (outside jit)
# ----------------------------------------------------------------------------
def init_params(key):
    ks = jax.random.split(key, 10)
    s = 0.05
    return {
        "conv1_w": jax.random.normal(ks[0], (6, 1, 5, 5), jnp.float32) * s,
        "conv1_b": jax.random.normal(ks[1], (6,), jnp.float32) * s,
        "conv2_w": jax.random.normal(ks[2], (16, 6, 5, 5), jnp.float32) * s,
        "conv2_b": jax.random.normal(ks[3], (16,), jnp.float32) * s,
        "fc1_w": jax.random.normal(ks[4], (120, 256), jnp.float32) * s,  # (out, in)
        "fc1_b": jax.random.normal(ks[5], (120,), jnp.float32) * s,
        "fc2_w": jax.random.normal(ks[6], (84, 120), jnp.float32) * s,
        "fc2_b": jax.random.normal(ks[7], (84,), jnp.float32) * s,
        "fc3_w": jax.random.normal(ks[8], (62, 84), jnp.float32) * s,
        "fc3_b": jax.random.normal(ks[9], (62,), jnp.float32) * s,
    }


def prepare_operands(params):
    """Repack torch-layout params into kernel operands (bf16 weights). Done once."""
    w1 = np.asarray(params["conv1_w"], np.float32)   # (6,1,5,5)
    b1 = np.asarray(params["conv1_b"], np.float32)
    w2 = np.asarray(params["conv2_w"], np.float32)   # (16,6,5,5)
    b2 = np.asarray(params["conv2_b"], np.float32)
    f1w = np.asarray(params["fc1_w"], np.float32)    # (120,256)
    f1b = np.asarray(params["fc1_b"], np.float32)
    f2w = np.asarray(params["fc2_w"], np.float32)    # (84,120)
    f2b = np.asarray(params["fc2_b"], np.float32)
    f3w = np.asarray(params["fc3_w"], np.float32)    # (62,84)
    f3b = np.asarray(params["fc3_b"], np.float32)

    # conv1 output column layout (parity-major halves for the matmul-free W-pool)
    def col1(wo, oc):          # wo < 24, oc < 6
        return (wo % 2) * 128 + (wo // 2) * 6 + oc

    m1 = np.zeros((5, 28, 256), np.float32)
    for ki in range(5):
        for wo in range(24):
            for kj in range(5):
                for oc in range(6):
                    m1[ki, wo + kj, col1(wo, oc)] = w1[oc, 0, ki, kj]
    b1t = np.zeros((1, 256), np.float32)
    for wo in range(24):
        for oc in range(6):
            b1t[0, col1(wo, oc)] = b1[oc]

    # conv2: input rows follow pool1 output cols (w_in*6 + ic, rows 72..127 zero);
    # output cols parity-major within 128 lanes.
    def col2(wo, oc):          # wo < 8, oc < 16
        return (wo % 2) * 64 + (wo // 2) * 16 + oc

    m2 = np.zeros((5, 128, 128), np.float32)
    for ki in range(5):
        for wo in range(8):
            for kj in range(5):
                for ic in range(6):
                    for oc in range(16):
                        m2[ki, (wo + kj) * 6 + ic, col2(wo, oc)] = w2[oc, ic, ki, kj]
    b2t = np.zeros((1, 128), np.float32)
    for wo in range(8):
        for oc in range(16):
            b2t[0, col2(wo, oc)] = b2[oc]

    # fc1 with the torch flatten order (f = oc*16 + h*4 + w) folded in, split by h:
    # w1h[h, w*16+oc, n] = fc1_w[n, oc*16 + h*4 + w]
    w1h = np.zeros((4, 64, 120), np.float32)
    for h in range(4):
        for w in range(4):
            for oc in range(16):
                w1h[h, w * 16 + oc, :] = f1w[:, oc * 16 + h * 4 + w]

    # fc3 padded to 64 lane-aligned outputs (wrapper slices back to 62).
    wf3 = np.zeros((84, 64), np.float32)
    wf3[:, :62] = f3w.T
    bf3 = np.zeros((1, 64), np.float32)
    bf3[0, :62] = f3b

    bf16 = jnp.bfloat16
    return [
        jnp.asarray(m1, bf16), jnp.asarray(b1t, jnp.float32),
        jnp.asarray(m2, bf16), jnp.asarray(b2t, jnp.float32),
        jnp.asarray(w1h, bf16), jnp.asarray(f1b.reshape(1, 120), jnp.float32),
        jnp.asarray(np.ascontiguousarray(f2w.T), bf16),
        jnp.asarray(f2b.reshape(1, 84), jnp.float32),
        jnp.asarray(wf3, bf16), jnp.asarray(bf3, jnp.float32),
    ]


# ----------------------------------------------------------------------------
# Forward pass (one pallas_call)
# ----------------------------------------------------------------------------
def cnn_forward(ops, x_nchw, tb=None):
    """x_nchw: (B, 1, 28, 28) float32 -> logits (B, 62)."""
    assert x_nchw.shape[1:] == (1, 28, 28), x_nchw.shape
    (m1, b1t, m2, b2t, w1h, bf1, wf2, bf2, wf3, bf3) = ops

    B = x_nchw.shape[0]
    if tb is None:
        tb = _pick_tb(B)
    assert tb % 8 == 0
    Bp = _round_up(B, tb)

    x = x_nchw[:, 0, :, :].astype(jnp.float32)           # (B, 28, 28)
    if Bp != B:
        x = jnp.pad(x, ((0, Bp - B), (0, 0), (0, 0)))    # pad batch (zeros, discarded)
    x_hbw = jnp.transpose(x, (1, 0, 2))                  # (28, Bp, 28): rows=h, sublane=b, lane=w

    def const_spec(a):
        nd = a.ndim
        return pl.BlockSpec(a.shape, lambda i, _nd=nd: (0,) * _nd)

    consts = [m1, b1t, m2, b2t, w1h, bf1, wf2, bf2, wf3, bf3]
    in_specs = ([pl.BlockSpec((28, tb, 28), lambda i: (0, i, 0))] +
                [const_spec(a) for a in consts])

    out = pl.pallas_call(
        fused_cnn_kernel,
        grid=(Bp // tb,),
        in_specs=in_specs,
        out_specs=pl.BlockSpec((tb, 64), lambda i: (i, 0)),
        out_shape=jax.ShapeDtypeStruct((Bp, 64), jnp.float32),
        compiler_params=pltpu.CompilerParams(
            dimension_semantics=("parallel",),
            vmem_limit_bytes=48 * 1024 * 1024),
    )(x_hbw, *consts)
    return out[:B, :62]


# ----------------------------------------------------------------------------
# Pure-JAX reference (mirrors the PyTorch module) for a correctness check
# ----------------------------------------------------------------------------
def reference_forward(params, x_nchw):
    hp = jax.lax.Precision.HIGHEST
    dn = ("NCHW", "OIHW", "NCHW")
    y = jax.lax.conv_general_dilated(x_nchw, params["conv1_w"], (1, 1), "VALID",
                                     dimension_numbers=dn, precision=hp)
    y = jax.nn.relu(y + params["conv1_b"][None, :, None, None])
    y = jax.lax.reduce_window(y, -jnp.inf, jax.lax.max,
                              (1, 1, 2, 2), (1, 1, 2, 2), "VALID")
    y = jax.lax.conv_general_dilated(y, params["conv2_w"], (1, 1), "VALID",
                                     dimension_numbers=dn, precision=hp)
    y = jax.nn.relu(y + params["conv2_b"][None, :, None, None])
    y = jax.lax.reduce_window(y, -jnp.inf, jax.lax.max,
                              (1, 1, 2, 2), (1, 1, 2, 2), "VALID")
    y = y.reshape(y.shape[0], -1)                        # torch.flatten(x, 1) order
    y = jax.nn.relu(jnp.dot(y, params["fc1_w"].T, precision=hp) + params["fc1_b"])
    y = jax.nn.relu(jnp.dot(y, params["fc2_w"].T, precision=hp) + params["fc2_b"])
    return jnp.dot(y, params["fc3_w"].T, precision=hp) + params["fc3_b"]


if __name__ == "__main__":
    key = jax.random.PRNGKey(0)
    pkey, xkey = jax.random.split(key)
    params = init_params(pkey)
    ops = prepare_operands(params)

    fwd = jax.jit(cnn_forward)
    ref_fwd = jax.jit(reference_forward)

    # batch=2 exercises the small-tile path (TB=8); batch=256 exercises the
    # performance configuration (TB=128, grid=2 => both v7x TensorCores busy).
    for batch in (2, 256):
        x = jax.random.normal(jax.random.fold_in(xkey, batch),
                              (batch, 1, 28, 28), jnp.float32)
        out = jax.block_until_ready(fwd(ops, x))
        assert out.shape == (batch, 62), out.shape
        ref = jax.block_until_ready(ref_fwd(params, x))
        max_diff = float(jnp.max(jnp.abs(out - ref)))
        if not np.isfinite(max_diff) or max_diff > 3e-2:
            raise AssertionError(
                f"batch={batch}: kernel/reference mismatch: max|diff| = {max_diff}")

    print("KERNEL_OK")
</pallas_src>

<mosaic_0001>
module attributes {stable_mosaic.version = 11 : i64} {
  func.func @fused_cnn_kernel(%arg0: i32, %arg1: memref<28x8x28xf32, #tpu.memory_space<vmem>>, %arg2: memref<5x28x256xbf16, #tpu.memory_space<vmem>>, %arg3: memref<1x256xf32, #tpu.memory_space<vmem>>, %arg4: memref<5x128x128xbf16, #tpu.memory_space<vmem>>, %arg5: memref<1x128xf32, #tpu.memory_space<vmem>>, %arg6: memref<4x64x120xbf16, #tpu.memory_space<vmem>>, %arg7: memref<1x120xf32, #tpu.memory_space<vmem>>, %arg8: memref<120x84xbf16, #tpu.memory_space<vmem>>, %arg9: memref<1x84xf32, #tpu.memory_space<vmem>>, %arg10: memref<84x64xbf16, #tpu.memory_space<vmem>>, %arg11: memref<1x64xf32, #tpu.memory_space<vmem>>, %arg12: memref<8x64xf32, #tpu.memory_space<vmem>>) attributes {dimension_semantics = [#tpu.dimension_semantics<parallel>], iteration_bounds = array<i64: 1>, scalar_prefetch = 0 : i64, scratch_operands = 0 : i64, tpu.core_type = #tpu.core_type<tc>, window_params = [{transform_indices = @transform_0, window_bounds = array<i64: 28, 8, 28>}, {pipeline_mode = #tpu.pipeline_mode<synchronous>, transform_indices = @transform_1, window_bounds = array<i64: 5, 28, 256>}, {pipeline_mode = #tpu.pipeline_mode<synchronous>, transform_indices = @transform_2, window_bounds = array<i64: 1, 256>}, {pipeline_mode = #tpu.pipeline_mode<synchronous>, transform_indices = @transform_3, window_bounds = array<i64: 5, 128, 128>}, {pipeline_mode = #tpu.pipeline_mode<synchronous>, transform_indices = @transform_4, window_bounds = array<i64: 1, 128>}, {pipeline_mode = #tpu.pipeline_mode<synchronous>, transform_indices = @transform_5, window_bounds = array<i64: 4, 64, 120>}, {pipeline_mode = #tpu.pipeline_mode<synchronous>, transform_indices = @transform_6, window_bounds = array<i64: 1, 120>}, {pipeline_mode = #tpu.pipeline_mode<synchronous>, transform_indices = @transform_7, window_bounds = array<i64: 120, 84>}, {pipeline_mode = #tpu.pipeline_mode<synchronous>, transform_indices = @transform_8, window_bounds = array<i64: 1, 84>}, {pipeline_mode = #tpu.pipeline_mode<synchronous>, transform_indices = @transform_9, window_bounds = array<i64: 84, 64>}, {pipeline_mode = #tpu.pipeline_mode<synchronous>, transform_indices = @transform_10, window_bounds = array<i64: 1, 64>}, {transform_indices = @transform_11, window_bounds = array<i64: 8, 64>}]} {
    %c0 = arith.constant 0 : index
    %c0_0 = arith.constant 0 : index
    %c0_1 = arith.constant 0 : index
    %0 = vector.load %arg1[%c0, %c0_0, %c0_1] : memref<28x8x28xf32, #tpu.memory_space<vmem>>, vector<28x8x28xf32>
    %1 = arith.truncf %0 : vector<28x8x28xf32> to vector<28x8x28xbf16>
    %2 = vector.extract_strided_slice %1 {offsets = [0, 0, 0], sizes = [24, 8, 28], strides = [1, 1, 1]} : vector<28x8x28xbf16> to vector<24x8x28xbf16>
    %3 = vector.shape_cast %2 : vector<24x8x28xbf16> to vector<192x28xbf16>
    %c0_2 = arith.constant 0 : index
    %c0_3 = arith.constant 0 : index
    %c0_4 = arith.constant 0 : index
    %4 = vector.load %arg2[%c0_2, %c0_3, %c0_4] : memref<5x28x256xbf16, #tpu.memory_space<vmem>>, vector<1x28x256xbf16>
    %5 = vector.shape_cast %4 : vector<1x28x256xbf16> to vector<28x256xbf16>
    %cst = arith.constant dense<0.000000e+00> : vector<192x256xf32>
    %6 = tpu.matmul %3, %5, %cst {dimension_numbers = #tpu.dot_dimension_numbers<[1], [0], [0], [1], [0, 0, 1, 1], [], []>} : vector<192x28xbf16>, vector<28x256xbf16>, vector<192x256xf32> -> vector<192x256xf32>
    %7 = vector.extract_strided_slice %1 {offsets = [1, 0, 0], sizes = [24, 8, 28], strides = [1, 1, 1]} : vector<28x8x28xbf16> to vector<24x8x28xbf16>
    %8 = vector.shape_cast %7 : vector<24x8x28xbf16> to vector<192x28xbf16>
    %c1 = arith.constant 1 : index
    %c0_5 = arith.constant 0 : index
    %c0_6 = arith.constant 0 : index
    %9 = vector.load %arg2[%c1, %c0_5, %c0_6] : memref<5x28x256xbf16, #tpu.memory_space<vmem>>, vector<1x28x256xbf16>
    %10 = vector.shape_cast %9 : vector<1x28x256xbf16> to vector<28x256xbf16>
    %cst_7 = arith.constant dense<0.000000e+00> : vector<192x256xf32>
    %11 = tpu.matmul %8, %10, %cst_7 {dimension_numbers = #tpu.dot_dimension_numbers<[1], [0], [0], [1], [0, 0, 1, 1], [], []>} : vector<192x28xbf16>, vector<28x256xbf16>, vector<192x256xf32> -> vector<192x256xf32>
    %12 = arith.addf %6, %11 : vector<192x256xf32>
    %13 = vector.extract_strided_slice %1 {offsets = [2, 0, 0], sizes = [24, 8, 28], strides = [1, 1, 1]} : vector<28x8x28xbf16> to vector<24x8x28xbf16>
    %14 = vector.shape_cast %13 : vector<24x8x28xbf16> to vector<192x28xbf16>
    %c2 = arith.constant 2 : index
    %c0_8 = arith.constant 0 : index
    %c0_9 = arith.constant 0 : index
    %15 = vector.load %arg2[%c2, %c0_8, %c0_9] : memref<5x28x256xbf16, #tpu.memory_space<vmem>>, vector<1x28x256xbf16>
    %16 = vector.shape_cast %15 : vector<1x28x256xbf16> to vector<28x256xbf16>
    %cst_10 = arith.constant dense<0.000000e+00> : vector<192x256xf32>
    %17 = tpu.matmul %14, %16, %cst_10 {dimension_numbers = #tpu.dot_dimension_numbers<[1], [0], [0], [1], [0, 0, 1, 1], [], []>} : vector<192x28xbf16>, vector<28x256xbf16>, vector<192x256xf32> -> vector<192x256xf32>
    %18 = arith.addf %12, %17 : vector<192x256xf32>
    %19 = vector.extract_strided_slice %1 {offsets = [3, 0, 0], sizes = [24, 8, 28], strides = [1, 1, 1]} : vector<28x8x28xbf16> to vector<24x8x28xbf16>
    %20 = vector.shape_cast %19 : vector<24x8x28xbf16> to vector<192x28xbf16>
    %c3 = arith.constant 3 : index
    %c0_11 = arith.constant 0 : index
    %c0_12 = arith.constant 0 : index
    %21 = vector.load %arg2[%c3, %c0_11, %c0_12] : memref<5x28x256xbf16, #tpu.memory_space<vmem>>, vector<1x28x256xbf16>
    %22 = vector.shape_cast %21 : vector<1x28x256xbf16> to vector<28x256xbf16>
    %cst_13 = arith.constant dense<0.000000e+00> : vector<192x256xf32>
    %23 = tpu.matmul %20, %22, %cst_13 {dimension_numbers = #tpu.dot_dimension_numbers<[1], [0], [0], [1], [0, 0, 1, 1], [], []>} : vector<192x28xbf16>, vector<28x256xbf16>, vector<192x256xf32> -> vector<192x256xf32>
    %24 = arith.addf %18, %23 : vector<192x256xf32>
    %25 = vector.extract_strided_slice %1 {offsets = [4, 0, 0], sizes = [24, 8, 28], strides = [1, 1, 1]} : vector<28x8x28xbf16> to vector<24x8x28xbf16>
    %26 = vector.shape_cast %25 : vector<24x8x28xbf16> to vector<192x28xbf16>
    %c4 = arith.constant 4 : index
    %c0_14 = arith.constant 0 : index
    %c0_15 = arith.constant 0 : index
    %27 = vector.load %arg2[%c4, %c0_14, %c0_15] : memref<5x28x256xbf16, #tpu.memory_space<vmem>>, vector<1x28x256xbf16>
    %28 = vector.shape_cast %27 : vector<1x28x256xbf16> to vector<28x256xbf16>
    %cst_16 = arith.constant dense<0.000000e+00> : vector<192x256xf32>
    %29 = tpu.matmul %26, %28, %cst_16 {dimension_numbers = #tpu.dot_dimension_numbers<[1], [0], [0], [1], [0, 0, 1, 1], [], []>} : vector<192x28xbf16>, vector<28x256xbf16>, vector<192x256xf32> -> vector<192x256xf32>
    %30 = arith.addf %24, %29 : vector<192x256xf32>
    %c0_17 = arith.constant 0 : index
    %c0_18 = arith.constant 0 : index
    %31 = vector.load %arg3[%c0_17, %c0_18] : memref<1x256xf32, #tpu.memory_space<vmem>>, vector<1x256xf32>
    %32 = vector.broadcast %31 : vector<1x256xf32> to vector<192x256xf32>
    %33 = arith.addf %30, %32 : vector<192x256xf32>
    %cst_19 = arith.constant 0.000000e+00 : f32
    %34 = vector.broadcast %cst_19 : f32 to vector<192x256xf32>
    %35 = arith.maximumf %33, %34 : vector<192x256xf32>
    %36 = vector.shape_cast %35 : vector<192x256xf32> to vector<12x16x256xf32>
    %37 = vector.extract_strided_slice %36 {offsets = [0, 0, 0], sizes = [12, 8, 256], strides = [1, 1, 1]} : vector<12x16x256xf32> to vector<12x8x256xf32>
    %38 = vector.extract_strided_slice %36 {offsets = [0, 8, 0], sizes = [12, 8, 256], strides = [1, 1, 1]} : vector<12x16x256xf32> to vector<12x8x256xf32>
    %39 = arith.maximumf %37, %38 : vector<12x8x256xf32>
    %40 = vector.shape_cast %39 : vector<12x8x256xf32> to vector<96x256xf32>
    %41 = vector.extract_strided_slice %40 {offsets = [0, 0], sizes = [96, 128], strides = [1, 1]} : vector<96x256xf32> to vector<96x128xf32>
    %42 = vector.extract_strided_slice %40 {offsets = [0, 128], sizes = [96, 128], strides = [1, 1]} : vector<96x256xf32> to vector<96x128xf32>
    %43 = arith.maximumf %41, %42 : vector<96x128xf32>
    %44 = arith.truncf %43 : vector<96x128xf32> to vector<96x128xbf16>
    %45 = vector.shape_cast %44 : vector<96x128xbf16> to vector<12x8x128xbf16>
    %46 = vector.extract_strided_slice %45 {offsets = [0, 0, 0], sizes = [8, 8, 128], strides = [1, 1, 1]} : vector<12x8x128xbf16> to vector<8x8x128xbf16>
    %47 = vector.shape_cast %46 : vector<8x8x128xbf16> to vector<64x128xbf16>
    %c0_20 = arith.constant 0 : index
    %c0_21 = arith.constant 0 : index
    %c0_22 = arith.constant 0 : index
    %48 = vector.load %arg4[%c0_20, %c0_21, %c0_22] : memref<5x128x128xbf16, #tpu.memory_space<vmem>>, vector<1x128x128xbf16>
    %49 = vector.shape_cast %48 : vector<1x128x128xbf16> to vector<128x128xbf16>
    %cst_23 = arith.constant dense<0.000000e+00> : vector<64x128xf32>
    %50 = tpu.matmul %47, %49, %cst_23 {dimension_numbers = #tpu.dot_dimension_numbers<[1], [0], [0], [1], [0, 0, 1, 1], [], []>} : vector<64x128xbf16>, vector<128x128xbf16>, vector<64x128xf32> -> vector<64x128xf32>
    %51 = vector.extract_strided_slice %45 {offsets = [1, 0, 0], sizes = [8, 8, 128], strides = [1, 1, 1]} : vector<12x8x128xbf16> to vector<8x8x128xbf16>
    %52 = vector.shape_cast %51 : vector<8x8x128xbf16> to vector<64x128xbf16>
    %c1_24 = arith.constant 1 : index
    %c0_25 = arith.constant 0 : index
    %c0_26 = arith.constant 0 : index
    %53 = vector.load %arg4[%c1_24, %c0_25, %c0_26] : memref<5x128x128xbf16, #tpu.memory_space<vmem>>, vector<1x128x128xbf16>
    %54 = vector.shape_cast %53 : vector<1x128x128xbf16> to vector<128x128xbf16>
    %cst_27 = arith.constant dense<0.000000e+00> : vector<64x128xf32>
    %55 = tpu.matmul %52, %54, %cst_27 {dimension_numbers = #tpu.dot_dimension_numbers<[1], [0], [0], [1], [0, 0, 1, 1], [], []>} : vector<64x128xbf16>, vector<128x128xbf16>, vector<64x128xf32> -> vector<64x128xf32>
    %56 = arith.addf %50, %55 : vector<64x128xf32>
    %57 = vector.extract_strided_slice %45 {offsets = [2, 0, 0], sizes = [8, 8, 128], strides = [1, 1, 1]} : vector<12x8x128xbf16> to vector<8x8x128xbf16>
    %58 = vector.shape_cast %57 : vector<8x8x128xbf16> to vector<64x128xbf16>
    %c2_28 = arith.constant 2 : index
    %c0_29 = arith.constant 0 : index
    %c0_30 = arith.constant 0 : index
    %59 = vector.load %arg4[%c2_28, %c0_29, %c0_30] : memref<5x128x128xbf16, #tpu.memory_space<vmem>>, vector<1x128x128xbf16>
    %60 = vector.shape_cast %59 : vector<1x128x128xbf16> to vector<128x128xbf16>
    %cst_31 = arith.constant dense<0.000000e+00> : vector<64x128xf32>
    %61 = tpu.matmul %58, %60, %cst_31 {dimension_numbers = #tpu.dot_dimension_numbers<[1], [0], [0], [1], [0, 0, 1, 1], [], []>} : vector<64x128xbf16>, vector<128x128xbf16>, vector<64x128xf32> -> vector<64x128xf32>
    %62 = arith.addf %56, %61 : vector<64x128xf32>
    %63 = vector.extract_strided_slice %45 {offsets = [3, 0, 0], sizes = [8, 8, 128], strides = [1, 1, 1]} : vector<12x8x128xbf16> to vector<8x8x128xbf16>
    %64 = vector.shape_cast %63 : vector<8x8x128xbf16> to vector<64x128xbf16>
    %c3_32 = arith.constant 3 : index
    %c0_33 = arith.constant 0 : index
    %c0_34 = arith.constant 0 : index
    %65 = vector.load %arg4[%c3_32, %c0_33, %c0_34] : memref<5x128x128xbf16, #tpu.memory_space<vmem>>, vector<1x128x128xbf16>
    %66 = vector.shape_cast %65 : vector<1x128x128xbf16> to vector<128x128xbf16>
    %cst_35 = arith.constant dense<0.000000e+00> : vector<64x128xf32>
    %67 = tpu.matmul %64, %66, %cst_35 {dimension_numbers = #tpu.dot_dimension_numbers<[1], [0], [0], [1], [0, 0, 1, 1], [], []>} : vector<64x128xbf16>, vector<128x128xbf16>, vector<64x128xf32> -> vector<64x128xf32>
    %68 = arith.addf %62, %67 : vector<64x128xf32>
    %69 = vector.extract_strided_slice %45 {offsets = [4, 0, 0], sizes = [8, 8, 128], strides = [1, 1, 1]} : vector<12x8x128xbf16> to vector<8x8x128xbf16>
    %70 = vector.shape_cast %69 : vector<8x8x128xbf16> to vector<64x128xbf16>
    %c4_36 = arith.constant 4 : index
    %c0_37 = arith.constant 0 : index
    %c0_38 = arith.constant 0 : index
    %71 = vector.load %arg4[%c4_36, %c0_37, %c0_38] : memref<5x128x128xbf16, #tpu.memory_space<vmem>>, vector<1x128x128xbf16>
    %72 = vector.shape_cast %71 : vector<1x128x128xbf16> to vector<128x128xbf16>
    %cst_39 = arith.constant dense<0.000000e+00> : vector<64x128xf32>
    %73 = tpu.matmul %70, %72, %cst_39 {dimension_numbers = #tpu.dot_dimension_numbers<[1], [0], [0], [1], [0, 0, 1, 1], [], []>} : vector<64x128xbf16>, vector<128x128xbf16>, vector<64x128xf32> -> vector<64x128xf32>
    %74 = arith.addf %68, %73 : vector<64x128xf32>
    %c0_40 = arith.constant 0 : index
    %c0_41 = arith.constant 0 : index
    %75 = vector.load %arg5[%c0_40, %c0_41] : memref<1x128xf32, #tpu.memory_space<vmem>>, vector<1x128xf32>
    %76 = vector.broadcast %75 : vector<1x128xf32> to vector<64x128xf32>
    %77 = arith.addf %74, %76 : vector<64x128xf32>
    %cst_42 = arith.constant 0.000000e+00 : f32
    %78 = vector.broadcast %cst_42 : f32 to vector<64x128xf32>
    %79 = arith.maximumf %77, %78 : vector<64x128xf32>
    %80 = vector.shape_cast %79 : vector<64x128xf32> to vector<4x16x128xf32>
    %81 = vector.extract_strided_slice %80 {offsets = [0, 0, 0], sizes = [4, 8, 128], strides = [1, 1, 1]} : vector<4x16x128xf32> to vector<4x8x128xf32>
    %82 = vector.extract_strided_slice %80 {offsets = [0, 8, 0], sizes = [4, 8, 128], strides = [1, 1, 1]} : vector<4x16x128xf32> to vector<4x8x128xf32>
    %83 = arith.maximumf %81, %82 : vector<4x8x128xf32>
    %84 = vector.shape_cast %83 : vector<4x8x128xf32> to vector<32x128xf32>
    %85 = vector.extract_strided_slice %84 {offsets = [0, 0], sizes = [32, 64], strides = [1, 1]} : vector<32x128xf32> to vector<32x64xf32>
    %86 = vector.extract_strided_slice %84 {offsets = [0, 64], sizes = [32, 64], strides = [1, 1]} : vector<32x128xf32> to vector<32x64xf32>
    %87 = arith.maximumf %85, %86 : vector<32x64xf32>
    %88 = arith.truncf %87 : vector<32x64xf32> to vector<32x64xbf16>
    %89 = vector.shape_cast %88 : vector<32x64xbf16> to vector<4x8x64xbf16>
    %c0_43 = arith.constant 0 : index
    %c0_44 = arith.constant 0 : index
    %90 = vector.load %arg7[%c0_43, %c0_44] : memref<1x120xf32, #tpu.memory_space<vmem>>, vector<1x120xf32>
    %91 = vector.extract_strided_slice %89 {offsets = [0, 0, 0], sizes = [1, 8, 64], strides = [1, 1, 1]} : vector<4x8x64xbf16> to vector<1x8x64xbf16>
    %92 = vector.shape_cast %91 : vector<1x8x64xbf16> to vector<8x64xbf16>
    %c0_45 = arith.constant 0 : index
    %c0_46 = arith.constant 0 : index
    %c0_47 = arith.constant 0 : index
    %93 = vector.load %arg6[%c0_45, %c0_46, %c0_47] : memref<4x64x120xbf16, #tpu.memory_space<vmem>>, vector<1x64x120xbf16>
    %94 = vector.shape_cast %93 : vector<1x64x120xbf16> to vector<64x120xbf16>
    %cst_48 = arith.constant dense<0.000000e+00> : vector<8x120xf32>
    %95 = tpu.matmul %92, %94, %cst_48 {dimension_numbers = #tpu.dot_dimension_numbers<[1], [0], [0], [1], [0, 0, 1, 1], [], []>} : vector<8x64xbf16>, vector<64x120xbf16>, vector<8x120xf32> -> vector<8x120xf32>
    %96 = vector.broadcast %90 : vector<1x120xf32> to vector<8x120xf32>
    %97 = arith.addf %96, %95 : vector<8x120xf32>
    %98 = vector.extract_strided_slice %89 {offsets = [1, 0, 0], sizes = [1, 8, 64], strides = [1, 1, 1]} : vector<4x8x64xbf16> to vector<1x8x64xbf16>
    %99 = vector.shape_cast %98 : vector<1x8x64xbf16> to vector<8x64xbf16>
    %c1_49 = arith.constant 1 : index
    %c0_50 = arith.constant 0 : index
    %c0_51 = arith.constant 0 : index
    %100 = vector.load %arg6[%c1_49, %c0_50, %c0_51] : memref<4x64x120xbf16, #tpu.memory_space<vmem>>, vector<1x64x120xbf16>
    %101 = vector.shape_cast %100 : vector<1x64x120xbf16> to vector<64x120xbf16>
    %cst_52 = arith.constant dense<0.000000e+00> : vector<8x120xf32>
    %102 = tpu.matmul %99, %101, %cst_52 {dimension_numbers = #tpu.dot_dimension_numbers<[1], [0], [0], [1], [0, 0, 1, 1], [], []>} : vector<8x64xbf16>, vector<64x120xbf16>, vector<8x120xf32> -> vector<8x120xf32>
    %103 = arith.addf %97, %102 : vector<8x120xf32>
    %104 = vector.extract_strided_slice %89 {offsets = [2, 0, 0], sizes = [1, 8, 64], strides = [1, 1, 1]} : vector<4x8x64xbf16> to vector<1x8x64xbf16>
    %105 = vector.shape_cast %104 : vector<1x8x64xbf16> to vector<8x64xbf16>
    %c2_53 = arith.constant 2 : index
    %c0_54 = arith.constant 0 : index
    %c0_55 = arith.constant 0 : index
    %106 = vector.load %arg6[%c2_53, %c0_54, %c0_55] : memref<4x64x120xbf16, #tpu.memory_space<vmem>>, vector<1x64x120xbf16>
    %107 = vector.shape_cast %106 : vector<1x64x120xbf16> to vector<64x120xbf16>
    %cst_56 = arith.constant dense<0.000000e+00> : vector<8x120xf32>
    %108 = tpu.matmul %105, %107, %cst_56 {dimension_numbers = #tpu.dot_dimension_numbers<[1], [0], [0], [1], [0, 0, 1, 1], [], []>} : vector<8x64xbf16>, vector<64x120xbf16>, vector<8x120xf32> -> vector<8x120xf32>
    %109 = arith.addf %103, %108 : vector<8x120xf32>
    %110 = vector.extract_strided_slice %89 {offsets = [3, 0, 0], sizes = [1, 8, 64], strides = [1, 1, 1]} : vector<4x8x64xbf16> to vector<1x8x64xbf16>
    %111 = vector.shape_cast %110 : vector<1x8x64xbf16> to vector<8x64xbf16>
    %c3_57 = arith.constant 3 : index
    %c0_58 = arith.constant 0 : index
    %c0_59 = arith.constant 0 : index
    %112 = vector.load %arg6[%c3_57, %c0_58, %c0_59] : memref<4x64x120xbf16, #tpu.memory_space<vmem>>, vector<1x64x120xbf16>
    %113 = vector.shape_cast %112 : vector<1x64x120xbf16> to vector<64x120xbf16>
    %cst_60 = arith.constant dense<0.000000e+00> : vector<8x120xf32>
    %114 = tpu.matmul %111, %113, %cst_60 {dimension_numbers = #tpu.dot_dimension_numbers<[1], [0], [0], [1], [0, 0, 1, 1], [], []>} : vector<8x64xbf16>, vector<64x120xbf16>, vector<8x120xf32> -> vector<8x120xf32>
    %115 = arith.addf %109, %114 : vector<8x120xf32>
    %cst_61 = arith.constant 0.000000e+00 : f32
    %116 = vector.broadcast %cst_61 : f32 to vector<8x120xf32>
    %117 = arith.maximumf %115, %116 : vector<8x120xf32>
    %118 = arith.truncf %117 : vector<8x120xf32> to vector<8x120xbf16>
    %c0_62 = arith.constant 0 : index
    %c0_63 = arith.constant 0 : index
    %119 = vector.load %arg8[%c0_62, %c0_63] : memref<120x84xbf16, #tpu.memory_space<vmem>>, vector<120x84xbf16>
    %cst_64 = arith.constant dense<0.000000e+00> : vector<8x84xf32>
    %120 = tpu.matmul %118, %119, %cst_64 {dimension_numbers = #tpu.dot_dimension_numbers<[1], [0], [0], [1], [0, 0, 1, 1], [], []>} : vector<8x120xbf16>, vector<120x84xbf16>, vector<8x84xf32> -> vector<8x84xf32>
    %c0_65 = arith.constant 0 : index
    %c0_66 = arith.constant 0 : index
    %121 = vector.load %arg9[%c0_65, %c0_66] : memref<1x84xf32, #tpu.memory_space<vmem>>, vector<1x84xf32>
    %122 = vector.broadcast %121 : vector<1x84xf32> to vector<8x84xf32>
    %123 = arith.addf %120, %122 : vector<8x84xf32>
    %cst_67 = arith.constant 0.000000e+00 : f32
    %124 = vector.broadcast %cst_67 : f32 to vector<8x84xf32>
    %125 = arith.maximumf %123, %124 : vector<8x84xf32>
    %126 = arith.truncf %125 : vector<8x84xf32> to vector<8x84xbf16>
    %c0_68 = arith.constant 0 : index
    %c0_69 = arith.constant 0 : index
    %127 = vector.load %arg10[%c0_68, %c0_69] : memref<84x64xbf16, #tpu.memory_space<vmem>>, vector<84x64xbf16>
    %cst_70 = arith.constant dense<0.000000e+00> : vector<8x64xf32>
    %128 = tpu.matmul %126, %127, %cst_70 {dimension_numbers = #tpu.dot_dimension_numbers<[1], [0], [0], [1], [0, 0, 1, 1], [], []>} : vector<8x84xbf16>, vector<84x64xbf16>, vector<8x64xf32> -> vector<8x64xf32>
    %c0_71 = arith.constant 0 : index
    %c0_72 = arith.constant 0 : index
    %129 = vector.load %arg11[%c0_71, %c0_72] : memref<1x64xf32, #tpu.memory_space<vmem>>, vector<1x64xf32>
    %130 = vector.broadcast %129 : vector<1x64xf32> to vector<8x64xf32>
    %131 = arith.addf %128, %130 : vector<8x64xf32>
    %c0_73 = arith.constant 0 : index
    %c0_74 = arith.constant 0 : index
    %132 = vector.load %arg12[%c0_73, %c0_74] : memref<8x64xf32, #tpu.memory_space<vmem>>, vector<8x64xf32>
    tpu.vector_store %arg12[%c0_73, %c0_74], %131 {strides = array<i32>} : memref<8x64xf32, #tpu.memory_space<vmem>>, vector<8x64xf32>,
    return
  }
  func.func @transform_0(%arg0: i32) -> (i32, i32, i32) {
    %c0_i32 = arith.constant 0 : i32
    %c0_i32_0 = arith.constant 0 : i32
    %c0_i32_1 = arith.constant 0 : i32
    return %c0_i32, %arg0, %c0_i32_0 : i32, i32, i32
  }
  func.func @transform_1(%arg0: i32) -> (i32, i32, i32) {
    %c0_i32 = arith.constant 0 : i32
    %c0_i32_0 = arith.constant 0 : i32
    %c0_i32_1 = arith.constant 0 : i32
    %c0_i32_2 = arith.constant 0 : i32
    return %c0_i32, %c0_i32_0, %c0_i32_1 : i32, i32, i32
  }
  func.func @transform_2(%arg0: i32) -> (i32, i32) {
    %c0_i32 = arith.constant 0 : i32
    %c0_i32_0 = arith.constant 0 : i32
    %c0_i32_1 = arith.constant 0 : i32
    return %c0_i32, %c0_i32_0 : i32, i32
  }
  func.func @transform_3(%arg0: i32) -> (i32, i32, i32) {
    %c0_i32 = arith.constant 0 : i32
    %c0_i32_0 = arith.constant 0 : i32
    %c0_i32_1 = arith.constant 0 : i32
    %c0_i32_2 = arith.constant 0 : i32
    return %c0_i32, %c0_i32_0, %c0_i32_1 : i32, i32, i32
  }
  func.func @transform_4(%arg0: i32) -> (i32, i32) {
    %c0_i32 = arith.constant 0 : i32
    %c0_i32_0 = arith.constant 0 : i32
    %c0_i32_1 = arith.constant 0 : i32
    return %c0_i32, %c0_i32_0 : i32, i32
  }
  func.func @transform_5(%arg0: i32) -> (i32, i32, i32) {
    %c0_i32 = arith.constant 0 : i32
    %c0_i32_0 = arith.constant 0 : i32
    %c0_i32_1 = arith.constant 0 : i32
    %c0_i32_2 = arith.constant 0 : i32
    return %c0_i32, %c0_i32_0, %c0_i32_1 : i32, i32, i32
  }
  func.func @transform_6(%arg0: i32) -> (i32, i32) {
    %c0_i32 = arith.constant 0 : i32
    %c0_i32_0 = arith.constant 0 : i32
    %c0_i32_1 = arith.constant 0 : i32
    return %c0_i32, %c0_i32_0 : i32, i32
  }
  func.func @transform_7(%arg0: i32) -> (i32, i32) {
    %c0_i32 = arith.constant 0 : i32
    %c0_i32_0 = arith.constant 0 : i32
    %c0_i32_1 = arith.constant 0 : i32
    return %c0_i32, %c0_i32_0 : i32, i32
  }
  func.func @transform_8(%arg0: i32) -> (i32, i32) {
    %c0_i32 = arith.constant 0 : i32
    %c0_i32_0 = arith.constant 0 : i32
    %c0_i32_1 = arith.constant 0 : i32
    return %c0_i32, %c0_i32_0 : i32, i32
  }
  func.func @transform_9(%arg0: i32) -> (i32, i32) {
    %c0_i32 = arith.constant 0 : i32
    %c0_i32_0 = arith.constant 0 : i32
    %c0_i32_1 = arith.constant 0 : i32
    return %c0_i32, %c0_i32_0 : i32, i32
  }
  func.func @transform_10(%arg0: i32) -> (i32, i32) {
    %c0_i32 = arith.constant 0 : i32
    %c0_i32_0 = arith.constant 0 : i32
    %c0_i32_1 = arith.constant 0 : i32
    return %c0_i32, %c0_i32_0 : i32, i32
  }
  func.func @transform_11(%arg0: i32) -> (i32, i32) {
    %c0_i32 = arith.constant 0 : i32
    %c0_i32_0 = arith.constant 0 : i32
    return %arg0, %c0_i32 : i32, i32
  }
}

</mosaic_0001>

<llo_original>
// kernel: cnn_forward.1
$region0: #{cnn_forward.1}
  #allocation0 [shape = 'u32[]', space=smem, size = 0x4, offset = 0x4, fixed_abs, tag = 'smem constant byte address 0x4 - core index']
  #allocation1 [shape = 'u32[144,128]{1,0:T(1,128)}', space=vmem, size = 0x12000, scoped, tag = 'internal scratch']
  %s0 = inlined_call_operand.vmem [shape: f32[28,8,28], index: 0, kind: input, shape index: {}]
  %s1 = inlined_call_operand.vmem [shape: bf16[5,28,256], index: 1, kind: input, shape index: {}]
  %s2 = inlined_call_operand.vmem [shape: f32[1,256], index: 2, kind: input, shape index: {}]
  %s3 = inlined_call_operand.vmem [shape: bf16[5,128,128], index: 3, kind: input, shape index: {}]
  %s4 = inlined_call_operand.vmem [shape: f32[1,128], index: 4, kind: input, shape index: {}]
  %s5 = inlined_call_operand.hbm [shape: bf16[4,64,120], index: 5, kind: input, shape index: {}]
  %s6 = inlined_call_operand.vmem [shape: f32[1,120], index: 6, kind: input, shape index: {}]
  %s7 = inlined_call_operand.vmem [shape: bf16[120,84], index: 7, kind: input, shape index: {}]
  %s8 = inlined_call_operand.vmem [shape: f32[1,84], index: 8, kind: input, shape index: {}]
  %s9 = inlined_call_operand.vmem [shape: bf16[84,64], index: 9, kind: input, shape index: {}]
  %s10 = inlined_call_operand.vmem [shape: f32[1,64], index: 10, kind: input, shape index: {}]
  %s11 = inlined_call_operand.vmem [shape: f32[8,64], index: 11, kind: output, shape index: {}]
  %s12 = sld [smem:[#allocation0]]
  $region58: #{cnn_forward.1} parent=0
    _
  %s14 = ssub.s32 1, %s12
  %s15 = scalar_select 0, %s14, %s12
  $region1: #{cnn_forward.1} parent=0
    #allocation2 [shape = 'u8[65536]{0}', space=vmem, size = 0x10000, scoped, tag = 'input window, operand 5, single buffered']
    #allocation3 [shape = 's32[1]{0}', space=sflag, size = 0x4, scoped, tag = 'scoped memory for cnn_forward.1']
    %16 = vsyncpa [#allocation3], 0
    // Predicated region
    $region2: #{cnn_forward.1} parent=1 // pred_check
      _
    $region3: #{cnn_forward.1} parent=1 // pred_check_branch
      %18 = sbr.rel (0) target = $region5
    $region4: #{cnn_forward.1} parent=1 // pred_region
      _
    $region5: #{cnn_forward.1} parent=1 // pred_fallthru
      _
    // Predicated region
    $region6: #{cnn_forward.1} parent=1 // pred_check
      _
    $region7: #{cnn_forward.1} parent=1 // pred_check_branch
      %20 = sbr.rel (0) target = $region9
    $region8: #{cnn_forward.1} parent=1 // pred_region
      _
    $region9: #{cnn_forward.1} parent=1 // pred_fallthru
      _
    // Predicated region
    $region10: #{cnn_forward.1} parent=1 // pred_check
      _
    $region11: #{cnn_forward.1} parent=1 // pred_check_branch
      %22 = sbr.rel (0) target = $region13
    $region12: #{cnn_forward.1} parent=1 // pred_region
      _
    $region13: #{cnn_forward.1} parent=1 // pred_fallthru
      _
    // Predicated region
    $region14: #{cnn_forward.1} parent=1 // pred_check
      _
    $region15: #{cnn_forward.1} parent=1 // pred_check_branch
      %24 = sbr.rel (0) target = $region17
    $region16: #{cnn_forward.1} parent=1 // pred_region
      _
    $region17: #{cnn_forward.1} parent=1 // pred_fallthru
      _
    // Predicated region
    $region18: #{cnn_forward.1} parent=1 // pred_check
      _
    $region19: #{cnn_forward.1} parent=1 // pred_check_branch
      %26 = sbr.rel (0) target = $region21
    $region20: #{cnn_forward.1} parent=1 // pred_region
      _
    $region21: #{cnn_forward.1} parent=1 // pred_fallthru
      _
    // Predicated region
    $region22: #{cnn_forward.1} parent=1 // pred_check
      _
    $region23: #{cnn_forward.1} parent=1 // pred_check_branch
      %28 = sbr.rel (0) target = $region25
    $region24: #{cnn_forward.1} parent=1 // pred_region
      %s30 = ssub.s32 2048, 2048
      %31 = vsyncadd [#allocation3], %s30
      %s32 = sshll.u32 [#allocation2], 4
      %s33 = int_to_ptr.vmem [resolvable:$true] %s32
      %38 = dma.hbm_to_vmem [thread:$0]  %s5, 2048, %s33, [#allocation3], 64, 64, 4
    $region25: #{cnn_forward.1} parent=1 // pred_fallthru
      _
    // Predicated region
    $region26: #{cnn_forward.1} parent=1 // pred_check
      _
    $region27: #{cnn_forward.1} parent=1 // pred_check_branch
      %40 = sbr.rel (0) target = $region29
    $region28: #{cnn_forward.1} parent=1 // pred_region
      _
    $region29: #{cnn_forward.1} parent=1 // pred_fallthru
      _
    // Predicated region
    $region30: #{cnn_forward.1} parent=1 // pred_check
      _
    $region31: #{cnn_forward.1} parent=1 // pred_check_branch
      %42 = sbr.rel (0) target = $region33
    $region32: #{cnn_forward.1} parent=1 // pred_region
      _
    $region33: #{cnn_forward.1} parent=1 // pred_fallthru
      _
    // Predicated region
    $region34: #{cnn_forward.1} parent=1 // pred_check
      _
    $region35: #{cnn_forward.1} parent=1 // pred_check_branch
      %44 = sbr.rel (0) target = $region37
    $region36: #{cnn_forward.1} parent=1 // pred_region
      _
    $region37: #{cnn_forward.1} parent=1 // pred_fallthru
      _
    // Predicated region
    $region38: #{cnn_forward.1} parent=1 // pred_check
      _
    $region39: #{cnn_forward.1} parent=1 // pred_check_branch
      %46 = sbr.rel (0) target = $region41
    $region40: #{cnn_forward.1} parent=1 // pred_region
      _
    $region41: #{cnn_forward.1} parent=1 // pred_fallthru
      _
    // Predicated region
    $region42: #{cnn_forward.1} parent=1 // pred_check
      _
    $region43: #{cnn_forward.1} parent=1 // pred_check_branch
      %48 = sbr.rel (0) target = $region45
    $region44: #{cnn_forward.1} parent=1 // pred_region
      _
    $region45: #{cnn_forward.1} parent=1 // pred_fallthru
      _
    // Predicated region
    $region46: #{cnn_forward.1} parent=1 // pred_check
      _
    $region47: #{cnn_forward.1} parent=1 // pred_check_branch
      %50 = sbr.rel (0) target = $region49
    $region48: #{cnn_forward.1} parent=1 // pred_region
      %51 = dma.done [#allocation3], 2048
    $region49: #{cnn_forward.1} parent=1 // pred_fallthru
      _
    %v53 = vld [vmem:[%s0] sm:$0xff]
    %v54 = vld [vmem:[%s0 + $0x8] sm:$0xff]
    %v55 = vld [vmem:[%s0 + $0x10] sm:$0xff]
    %v56 = vld [vmem:[%s0 + $0x18] sm:$0xff]
    %v57 = vld [vmem:[%s0 + $0x20] sm:$0xff]
    %v58 = vld [vmem:[%s0 + $0x28] sm:$0xff]
    %v59 = vld [vmem:[%s0 + $0x30] sm:$0xff]
    %v60 = vld [vmem:[%s0 + $0x38] sm:$0xff]
    %v61 = vld [vmem:[%s0 + $0x40] sm:$0xff]
    %v62 = vld [vmem:[%s0 + $0x48] sm:$0xff]
    %v63 = vld [vmem:[%s0 + $0x50] sm:$0xff]
    %v64 = vld [vmem:[%s0 + $0x58] sm:$0xff]
    %v65 = vld [vmem:[%s0 + $0x60] sm:$0xff]
    %v66 = vld [vmem:[%s0 + $0x68] sm:$0xff]
    %v67 = vld [vmem:[%s0 + $0x70] sm:$0xff]
    %v68 = vld [vmem:[%s0 + $0x78] sm:$0xff]
    %v69 = vld [vmem:[%s0 + $0x80] sm:$0xff]
    %v70 = vld [vmem:[%s0 + $0x88] sm:$0xff]
    %v71 = vld [vmem:[%s0 + $0x90] sm:$0xff]
    %v72 = vld [vmem:[%s0 + $0x98] sm:$0xff]
    %v73 = vld [vmem:[%s0 + $0xa0] sm:$0xff]
    %v74 = vld [vmem:[%s0 + $0xa8] sm:$0xff]
    %v75 = vld [vmem:[%s0 + $0xb0] sm:$0xff]
    %v76 = vld [vmem:[%s0 + $0xb8] sm:$0xff]
    %v77 = vld [vmem:[%s0 + $0xc0] sm:$0xff]
    %v78 = vld [vmem:[%s0 + $0xc8] sm:$0xff]
    %v79 = vld [vmem:[%s0 + $0xd0] sm:$0xff]
    %v80 = vld [vmem:[%s0 + $0xd8] sm:$0xff]
    %v81 = vpack.c.bf16 %v53, %v53
    %v82 = vpack.c.bf16 %v54, %v54
    %v83 = vpack.c.bf16 %v55, %v55
    %v84 = vpack.c.bf16 %v56, %v56
    %v85 = vpack.c.bf16 %v57, %v57
    %v86 = vpack.c.bf16 %v58, %v58
    %v87 = vpack.c.bf16 %v59, %v59
    %v88 = vpack.c.bf16 %v60, %v60
    %v89 = vpack.c.bf16 %v61, %v61
    %v90 = vpack.c.bf16 %v62, %v62
    %v91 = vpack.c.bf16 %v63, %v63
    %v92 = vpack.c.bf16 %v64, %v64
    %v93 = vpack.c.bf16 %v65, %v65
    %v94 = vpack.c.bf16 %v66, %v66
    %v95 = vpack.c.bf16 %v67, %v67
    %v96 = vpack.c.bf16 %v68, %v68
    %v97 = vpack.c.bf16 %v69, %v69
    %v98 = vpack.c.bf16 %v70, %v70
    %v99 = vpack.c.bf16 %v71, %v71
    %v100 = vpack.c.bf16 %v72, %v72
    %v101 = vpack.c.bf16 %v73, %v73
    %v102 = vpack.c.bf16 %v74, %v74
    %v103 = vpack.c.bf16 %v75, %v75
    %v104 = vpack.c.bf16 %v76, %v76
    %v105 = vpack.c.bf16 %v77, %v77
    %v106 = vpack.c.bf16 %v78, %v78
    %v107 = vpack.c.bf16 %v79, %v79
    %v108 = vpack.c.bf16 %v80, %v80
    %v109 = vld [vmem:[%s1] sm:$0xff]
    %v110 = vld [vmem:[%s1 + $0x8] sm:$0xff]
    %v111 = vld [vmem:[%s1 + $0x10] sm:$0xff]
    %v112 = vld [vmem:[%s1 + $0x18] sm:$0x33]
    %s113 = scalar_lea.vmem %s1, 32
    %v114 = vld [vmem:[%s113] sm:$0xff]
    %v115 = vld [vmem:[%s113 + $0x8] sm:$0xff]
    %v116 = vld [vmem:[%s113 + $0x10] sm:$0xff]
    %v117 = vld [vmem:[%s113 + $0x18] sm:$0x33]
    %v142 = vunpack.c.l.b16 %v82
    %v143 = vunpack.c.l.b16 %v83
    %v144 = vunpack.c.l.b16 %v84
    %v145 = vunpack.c.l.b16 %v85
    %v146 = vunpack.c.l.b16 %v86
    %v147 = vunpack.c.l.b16 %v87
    %v148 = vunpack.c.l.b16 %v88
    %v149 = vunpack.c.l.b16 %v89
    %v150 = vunpack.c.l.b16 %v90
    %v151 = vunpack.c.l.b16 %v91
    %v152 = vunpack.c.l.b16 %v92
    %v153 = vunpack.c.l.b16 %v93
    %v154 = vunpack.c.l.b16 %v94
    %v155 = vunpack.c.l.b16 %v95
    %v156 = vunpack.c.l.b16 %v96
    %v157 = vunpack.c.l.b16 %v97
    %v158 = vunpack.c.l.b16 %v98
    %v159 = vunpack.c.l.b16 %v99
    %v160 = vunpack.c.l.b16 %v100
    %v161 = vunpack.c.l.b16 %v101
    %v162 = vunpack.c.l.b16 %v102
    %v163 = vunpack.c.l.b16 %v103
    %v164 = vunpack.c.l.b16 %v104
    %v165 = vunpack.c.l.b16 %v105
    %v166 = vpack.c.b16 %v143, %v142
    %v167 = vpack.c.b16 %v145, %v144
    %v168 = vpack.c.b16 %v147, %v146
    %v169 = vpack.c.b16 %v149, %v148
    %v170 = vpack.c.b16 %v151, %v150
    %v171 = vpack.c.b16 %v153, %v152
    %v172 = vpack.c.b16 %v155, %v154
    %v173 = vpack.c.b16 %v157, %v156
    %v174 = vpack.c.b16 %v159, %v158
    %v175 = vpack.c.b16 %v161, %v160
    %v176 = vpack.c.b16 %v163, %v162
    %v177 = vpack.c.b16 %v165, %v164
    %v182 = vunpack.c.l.b16 %v114
    %v183 = vunpack.c.h.b16 %v114
    %v184 = vunpack.c.l.b16 %v115
    %v185 = vunpack.c.h.b16 %v115
    %v186 = vunpack.c.l.b16 %v116
    %v187 = vunpack.c.h.b16 %v116
    %v188 = vunpack.c.l.b16 %v117
    %v189 = vunpack.c.h.b16 %v117
    %v190 = vpack.c.b16 %v184, %v182
    %v191 = vpack.c.b16 %v185, %v183
    %v192 = vpack.c.b16 %v188, %v186
    %v193 = vpack.c.b16 %v189, %v187
    %vm196 = vcmask 228352
    %v198 = vsel %vm196, %v166, 0
    %v201 = vsel %vm196, %v167, 0
    %v204 = vsel %vm196, %v168, 0
    %v207 = vsel %vm196, %v169, 0
    %v210 = vsel %vm196, %v170, 0
    %v213 = vsel %vm196, %v171, 0
    %v216 = vsel %vm196, %v172, 0
    %v219 = vsel %vm196, %v173, 0
    %v222 = vsel %vm196, %v174, 0
    %v225 = vsel %vm196, %v175, 0
    %v228 = vsel %vm196, %v176, 0
    %v231 = vsel %vm196, %v177, 0
    %vm233 = vcmask 1045504
    %v235 = vsel %vm233, %v192, 0
    %v238 = vsel %vm233, %v193, 0
    %240 = vmatprep.subr.bf16.mxu0 %v191
    %241 = vmatpush1.bf16.msra.mxu0 %v190
    %242 = vmatprep.subr.bf16.mxu0 %v238
    %243 = vmatpush1.bf16.msra.mxu0 %v235
    %244 = vmatprep.subr.bf16.mxu0 0
    %245 = vmatpush1.bf16.msra.mxu0 0
    %246 = vmatprep.subr.bf16.mxu0 0
    %247 = vmatpush1.bf16.msra.mxu0 0
    %248 = vmatprep.subr.bf16.mxu0 0
    %249 = vmatpush1.bf16.msra.mxu0 0
    %250 = vmatprep.subr.bf16.mxu0 0
    %251 = vmatpush1.bf16.msra.mxu0 0
    %252 = vmatprep.subr.bf16.mxu0 0
    %253 = vmatpush1.bf16.msra.mxu0 0
    %254 = vmatprep.subr.bf16.mxu0 0
    %255 = vmatpush1.bf16.msra.mxu0 0
    %256 = vmatprep.subr.bf16.mxu0 0
    %257 = vmatpush1.bf16.msra.mxu0 0
    %258 = vmatprep.subr.bf16.mxu0 0
    %259 = vmatpush1.bf16.msra.mxu0 0
    %260 = vmatprep.subr.bf16.mxu0 0
    %261 = vmatpush1.bf16.msra.mxu0 0
    %262 = vmatprep.subr.bf16.mxu0 0
    %263 = vmatpush1.bf16.msra.mxu0 0
    %264 = vmatprep.subr.bf16.mxu0 0
    %265 = vmatpush1.bf16.msra.mxu0 0
    %266 = vmatprep.subr.bf16.mxu0 0
    %267 = vmatpush1.bf16.msra.mxu0 0
    %268 = vmatprep.subr.bf16.mxu0 0
    %269 = vmatpush1.bf16.msra.mxu0 0
    %270 = vmatprep.subr.bf16.mxu0 0
    %271 = vmatpush1.bf16.msra.mxu0 0
    %272 = vmatprep.mubr.bf16.mxu0 0
    %273 = vmatmul.mubr.bf16.gmra.mrb[0].mxu0 %v198
    %v274 = vpop.f32.mrb[0].mxu0
    %v275 = vadd.f32 0.0, %v274
    %v276 = vpop.f32.mrb[0].mxu0
    %v277 = vadd.f32 0.0, %v276
    %v278 = vpop.f32.mrb[0].mxu0
    %v279 = vadd.f32 0.0, %v278
    %v280 = vpop.f32.mrb[0].mxu0
    %v281 = vadd.f32 0.0, %v280
    %282 = vmatprep.mubr.bf16.mxu0 0
    %283 = vmatmul.mubr.bf16.gmra.mrb[0].mxu0 %v201
    %v284 = vpop.f32.mrb[0].mxu0
    %v285 = vadd.f32 0.0, %v284
    %v286 = vpop.f32.mrb[0].mxu0
    %v287 = vadd.f32 0.0, %v286
    %v288 = vpop.f32.mrb[0].mxu0
    %v289 = vadd.f32 0.0, %v288
    %v290 = vpop.f32.mrb[0].mxu0
    %v291 = vadd.f32 0.0, %v290
    %292 = vmatprep.mubr.bf16.mxu0 0
    %293 = vmatmul.mubr.bf16.gmra.mrb[0].mxu0 %v204
    %v294 = vpop.f32.mrb[0].mxu0
    %v295 = vadd.f32 0.0, %v294
    %v296 = vpop.f32.mrb[0].mxu0
    %v297 = vadd.f32 0.0, %v296
    %v298 = vpop.f32.mrb[0].mxu0
    %v299 = vadd.f32 0.0, %v298
    %v300 = vpop.f32.mrb[0].mxu0
    %v301 = vadd.f32 0.0, %v300
    %302 = vmatprep.mubr.bf16.mxu0 0
    %303 = vmatmul.mubr.bf16.gmra.mrb[0].mxu0 %v207
    %v304 = vpop.f32.mrb[0].mxu0
    %v305 = vadd.f32 0.0, %v304
    %v306 = vpop.f32.mrb[0].mxu0
    %v307 = vadd.f32 0.0, %v306
    %v308 = vpop.f32.mrb[0].mxu0
    %v309 = vadd.f32 0.0, %v308
    %v310 = vpop.f32.mrb[0].mxu0
    %v311 = vadd.f32 0.0, %v310
    %312 = vmatprep.mubr.bf16.mxu0 0
    %313 = vmatmul.mubr.bf16.gmra.mrb[0].mxu0 %v210
    %v314 = vpop.f32.mrb[0].mxu0
    %v315 = vadd.f32 0.0, %v314
    %v316 = vpop.f32.mrb[0].mxu0
    %v317 = vadd.f32 0.0, %v316
    %v318 = vpop.f32.mrb[0].mxu0
    %v319 = vadd.f32 0.0, %v318
    %v320 = vpop.f32.mrb[0].mxu0
    %v321 = vadd.f32 0.0, %v320
    %322 = vmatprep.mubr.bf16.mxu0 0
    %323 = vmatmul.mubr.bf16.gmra.mrb[0].mxu0 %v213
    %v324 = vpop.f32.mrb[0].mxu0
    %v325 = vadd.f32 0.0, %v324
    %v326 = vpop.f32.mrb[0].mxu0
    %v327 = vadd.f32 0.0, %v326
    %v328 = vpop.f32.mrb[0].mxu0
    %v329 = vadd.f32 0.0, %v328
    %v330 = vpop.f32.mrb[0].mxu0
    %v331 = vadd.f32 0.0, %v330
    %332 = vmatprep.mubr.bf16.mxu0 0
    %333 = vmatmul.mubr.bf16.gmra.mrb[0].mxu0 %v216
    %v334 = vpop.f32.mrb[0].mxu0
    %v335 = vadd.f32 0.0, %v334
    %v336 = vpop.f32.mrb[0].mxu0
    %v337 = vadd.f32 0.0, %v336
    %v338 = vpop.f32.mrb[0].mxu0
    %v339 = vadd.f32 0.0, %v338
    %v340 = vpop.f32.mrb[0].mxu0
    %v341 = vadd.f32 0.0, %v340
    %342 = vmatprep.mubr.bf16.mxu0 0
    %343 = vmatmul.mubr.bf16.gmra.mrb[0].mxu0 %v219
    %v344 = vpop.f32.mrb[0].mxu0
    %v345 = vadd.f32 0.0, %v344
    %v346 = vpop.f32.mrb[0].mxu0
    %v347 = vadd.f32 0.0, %v346
    %v348 = vpop.f32.mrb[0].mxu0
    %v349 = vadd.f32 0.0, %v348
    %v350 = vpop.f32.mrb[0].mxu0
    %v351 = vadd.f32 0.0, %v350
    %352 = vmatprep.mubr.bf16.mxu0 0
    %353 = vmatmul.mubr.bf16.gmra.mrb[0].mxu0 %v222
    %v354 = vpop.f32.mrb[0].mxu0
    %v355 = vadd.f32 0.0, %v354
    %v356 = vpop.f32.mrb[0].mxu0
    %v357 = vadd.f32 0.0, %v356
    %v358 = vpop.f32.mrb[0].mxu0
    %v359 = vadd.f32 0.0, %v358
    %v360 = vpop.f32.mrb[0].mxu0
    %v361 = vadd.f32 0.0, %v360
    %362 = vmatprep.mubr.bf16.mxu0 0
    %363 = vmatmul.mubr.bf16.gmra.mrb[0].mxu0 %v225
    %v364 = vpop.f32.mrb[0].mxu0
    %v365 = vadd.f32 0.0, %v364
    %v366 = vpop.f32.mrb[0].mxu0
    %v367 = vadd.f32 0.0, %v366
    %v368 = vpop.f32.mrb[0].mxu0
    %v369 = vadd.f32 0.0, %v368
    %v370 = vpop.f32.mrb[0].mxu0
    %v371 = vadd.f32 0.0, %v370
    %372 = vmatprep.mubr.bf16.mxu0 0
    %373 = vmatmul.mubr.bf16.gmra.mrb[0].mxu0 %v228
    %v374 = vpop.f32.mrb[0].mxu0
    %v375 = vadd.f32 0.0, %v374
    %v376 = vpop.f32.mrb[0].mxu0
    %v377 = vadd.f32 0.0, %v376
    %v378 = vpop.f32.mrb[0].mxu0
    %v379 = vadd.f32 0.0, %v378
    %v380 = vpop.f32.mrb[0].mxu0
    %v381 = vadd.f32 0.0, %v380
    %382 = vmatprep.mubr.bf16.mxu0 0
    %383 = vmatmul.mubr.bf16.gmra.mrb[0].mxu0 %v231
    %v384 = vpop.f32.mrb[0].mxu0
    %v385 = vadd.f32 0.0, %v384
    %v386 = vpop.f32.mrb[0].mxu0
    %v387 = vadd.f32 0.0, %v386
    %v388 = vpop.f32.mrb[0].mxu0
    %v389 = vadd.f32 0.0, %v388
    %v390 = vpop.f32.mrb[0].mxu0
    %v391 = vadd.f32 0.0, %v390
    %392 = vdwg.mxu0
    %v394 = vunpack.c.l.b16 %v81
    %v395 = vpack.c.b16 %v142, %v394
    %v396 = vpack.c.b16 %v144, %v143
    %v397 = vpack.c.b16 %v146, %v145
    %v398 = vpack.c.b16 %v148, %v147
    %v399 = vpack.c.b16 %v150, %v149
    %v400 = vpack.c.b16 %v152, %v151
    %v401 = vpack.c.b16 %v154, %v153
    %v402 = vpack.c.b16 %v156, %v155
    %v403 = vpack.c.b16 %v158, %v157
    %v404 = vpack.c.b16 %v160, %v159
    %v405 = vpack.c.b16 %v162, %v161
    %v406 = vpack.c.b16 %v164, %v163
    %v411 = vunpack.c.l.b16 %v109
    %v412 = vunpack.c.h.b16 %v109
    %v413 = vunpack.c.l.b16 %v110
    %v414 = vunpack.c.h.b16 %v110
    %v415 = vunpack.c.l.b16 %v111
    %v416 = vunpack.c.h.b16 %v111
    %v417 = vunpack.c.l.b16 %v112
    %v418 = vunpack.c.h.b16 %v112
    %v419 = vpack.c.b16 %v413, %v411
    %v420 = vpack.c.b16 %v414, %v412
    %v421 = vpack.c.b16 %v417, %v415
    %v422 = vpack.c.b16 %v418, %v416
    %v426 = vsel %vm196, %v395, 0
    %v429 = vsel %vm196, %v396, 0
    %v432 = vsel %vm196, %v397, 0
    %v435 = vsel %vm196, %v398, 0
    %v438 = vsel %vm196, %v399, 0
    %v441 = vsel %vm196, %v400, 0
    %v444 = vsel %vm196, %v401, 0
    %v447 = vsel %vm196, %v402, 0
    %v450 = vsel %vm196, %v403, 0
    %v453 = vsel %vm196, %v404, 0
    %v456 = vsel %vm196, %v405, 0
    %v459 = vsel %vm196, %v406, 0
    %v462 = vsel %vm233, %v421, 0
    %v465 = vsel %vm233, %v422, 0
    %467 = vmatprep.subr.bf16.mxu0 %v420
    %468 = vmatpush1.bf16.msra.mxu0 %v419
    %469 = vmatprep.subr.bf16.mxu0 %v465
    %470 = vmatpush1.bf16.msra.mxu0 %v462
    %471 = vmatprep.subr.bf16.mxu0 0
    %472 = vmatpush1.bf16.msra.mxu0 0
    %473 = vmatprep.subr.bf16.mxu0 0
    %474 = vmatpush1.bf16.msra.mxu0 0
    %475 = vmatprep.subr.bf16.mxu0 0
    %476 = vmatpush1.bf16.msra.mxu0 0
    %477 = vmatprep.subr.bf16.mxu0 0
    %478 = vmatpush1.bf16.msra.mxu0 0
    %479 = vmatprep.subr.bf16.mxu0 0
    %480 = vmatpush1.bf16.msra.mxu0 0
    %481 = vmatprep.subr.bf16.mxu0 0
    %482 = vmatpush1.bf16.msra.mxu0 0
    %483 = vmatprep.subr.bf16.mxu0 0
    %484 = vmatpush1.bf16.msra.mxu0 0
    %485 = vmatprep.subr.bf16.mxu0 0
    %486 = vmatpush1.bf16.msra.mxu0 0
    %487 = vmatprep.subr.bf16.mxu0 0
    %488 = vmatpush1.bf16.msra.mxu0 0
    %489 = vmatprep.subr.bf16.mxu0 0
    %490 = vmatpush1.bf16.msra.mxu0 0
    %491 = vmatprep.subr.bf16.mxu0 0
    %492 = vmatpush1.bf16.msra.mxu0 0
    %493 = vmatprep.subr.bf16.mxu0 0
    %494 = vmatpush1.bf16.msra.mxu0 0
    %495 = vmatprep.subr.bf16.mxu0 0
    %496 = vmatpush1.bf16.msra.mxu0 0
    %497 = vmatprep.subr.bf16.mxu0 0
    %498 = vmatpush1.bf16.msra.mxu0 0
    %499 = vmatprep.mubr.bf16.mxu0 0
    %500 = vmatmul.mubr.bf16.gmra.mrb[0].mxu0 %v426
    %v501 = vpop.f32.mrb[0].mxu0
    %v502 = vadd.f32 %v275, %v501
    %v503 = vpop.f32.mrb[0].mxu0
    %v504 = vadd.f32 %v277, %v503
    %v505 = vpop.f32.mrb[0].mxu0
    %v506 = vadd.f32 %v279, %v505
    %v507 = vpop.f32.mrb[0].mxu0
    %v508 = vadd.f32 %v281, %v507
    %509 = vmatprep.mubr.bf16.mxu0 0
    %510 = vmatmul.mubr.bf16.gmra.mrb[0].mxu0 %v429
    %v511 = vpop.f32.mrb[0].mxu0
    %v512 = vadd.f32 %v285, %v511
    %v513 = vpop.f32.mrb[0].mxu0
    %v514 = vadd.f32 %v287, %v513
    %v515 = vpop.f32.mrb[0].mxu0
    %v516 = vadd.f32 %v289, %v515
    %v517 = vpop.f32.mrb[0].mxu0
    %v518 = vadd.f32 %v291, %v517
    %519 = vmatprep.mubr.bf16.mxu0 0
    %520 = vmatmul.mubr.bf16.gmra.mrb[0].mxu0 %v432
    %v521 = vpop.f32.mrb[0].mxu0
    %v522 = vadd.f32 %v295, %v521
    %v523 = vpop.f32.mrb[0].mxu0
    %v524 = vadd.f32 %v297, %v523
    %v525 = vpop.f32.mrb[0].mxu0
    %v526 = vadd.f32 %v299, %v525
    %v527 = vpop.f32.mrb[0].mxu0
    %v528 = vadd.f32 %v301, %v527
    %529 = vmatprep.mubr.bf16.mxu0 0
    %530 = vmatmul.mubr.bf16.gmra.mrb[0].mxu0 %v435
    %v531 = vpop.f32.mrb[0].mxu0
    %v532 = vadd.f32 %v305, %v531
    %v533 = vpop.f32.mrb[0].mxu0
    %v534 = vadd.f32 %v307, %v533
    %v535 = vpop.f32.mrb[0].mxu0
    %v536 = vadd.f32 %v309, %v535
    %v537 = vpop.f32.mrb[0].mxu0
    %v538 = vadd.f32 %v311, %v537
    %539 = vmatprep.mubr.bf16.mxu0 0
    %540 = vmatmul.mubr.bf16.gmra.mrb[0].mxu0 %v438
    %v541 = vpop.f32.mrb[0].mxu0
    %v542 = vadd.f32 %v315, %v541
    %v543 = vpop.f32.mrb[0].mxu0
    %v544 = vadd.f32 %v317, %v543
    %v545 = vpop.f32.mrb[0].mxu0
    %v546 = vadd.f32 %v319, %v545
    %v547 = vpop.f32.mrb[0].mxu0
    %v548 = vadd.f32 %v321, %v547
    %549 = vmatprep.mubr.bf16.mxu0 0
    %550 = vmatmul.mubr.bf16.gmra.mrb[0].mxu0 %v441
    %v551 = vpop.f32.mrb[0].mxu0
    %v552 = vadd.f32 %v325, %v551
    %v553 = vpop.f32.mrb[0].mxu0
    %v554 = vadd.f32 %v327, %v553
    %v555 = vpop.f32.mrb[0].mxu0
    %v556 = vadd.f32 %v329, %v555
    %v557 = vpop.f32.mrb[0].mxu0
    %v558 = vadd.f32 %v331, %v557
    %559 = vmatprep.mubr.bf16.mxu0 0
    %560 = vmatmul.mubr.bf16.gmra.mrb[0].mxu0 %v444
    %v561 = vpop.f32.mrb[0].mxu0
    %v562 = vadd.f32 %v335, %v561
    %v563 = vpop.f32.mrb[0].mxu0
    %v564 = vadd.f32 %v337, %v563
    %v565 = vpop.f32.mrb[0].mxu0
    %v566 = vadd.f32 %v339, %v565
    %v567 = vpop.f32.mrb[0].mxu0
    %v568 = vadd.f32 %v341, %v567
    %569 = vmatprep.mubr.bf16.mxu0 0
    %570 = vmatmul.mubr.bf16.gmra.mrb[0].mxu0 %v447
    %v571 = vpop.f32.mrb[0].mxu0
    %v572 = vadd.f32 %v345, %v571
    %v573 = vpop.f32.mrb[0].mxu0
    %v574 = vadd.f32 %v347, %v573
    %v575 = vpop.f32.mrb[0].mxu0
    %v576 = vadd.f32 %v349, %v575
    %v577 = vpop.f32.mrb[0].mxu0
    %v578 = vadd.f32 %v351, %v577
    %579 = vmatprep.mubr.bf16.mxu0 0
    %580 = vmatmul.mubr.bf16.gmra.mrb[0].mxu0 %v450
    %v581 = vpop.f32.mrb[0].mxu0
    %v582 = vadd.f32 %v355, %v581
    %v583 = vpop.f32.mrb[0].mxu0
    %v584 = vadd.f32 %v357, %v583
    %v585 = vpop.f32.mrb[0].mxu0
    %v586 = vadd.f32 %v359, %v585
    %v587 = vpop.f32.mrb[0].mxu0
    %v588 = vadd.f32 %v361, %v587
    %589 = vmatprep.mubr.bf16.mxu0 0
    %590 = vmatmul.mubr.bf16.gmra.mrb[0].mxu0 %v453
    %v591 = vpop.f32.mrb[0].mxu0
    %v592 = vadd.f32 %v365, %v591
    %v593 = vpop.f32.mrb[0].mxu0
    %v594 = vadd.f32 %v367, %v593
    %v595 = vpop.f32.mrb[0].mxu0
    %v596 = vadd.f32 %v369, %v595
    %v597 = vpop.f32.mrb[0].mxu0
    %v598 = vadd.f32 %v371, %v597
    %599 = vmatprep.mubr.bf16.mxu0 0
    %600 = vmatmul.mubr.bf16.gmra.mrb[0].mxu0 %v456
    %v601 = vpop.f32.mrb[0].mxu0
    %v602 = vadd.f32 %v375, %v601
    %v603 = vpop.f32.mrb[0].mxu0
    %v604 = vadd.f32 %v377, %v603
    %v605 = vpop.f32.mrb[0].mxu0
    %v606 = vadd.f32 %v379, %v605
    %v607 = vpop.f32.mrb[0].mxu0
    %v608 = vadd.f32 %v381, %v607
    %609 = vmatprep.mubr.bf16.mxu0 0
    %610 = vmatmul.mubr.bf16.gmra.mrb[0].mxu0 %v459
    %v611 = vpop.f32.mrb[0].mxu0
    %v612 = vadd.f32 %v385, %v611
    %v613 = vpop.f32.mrb[0].mxu0
    %v614 = vadd.f32 %v387, %v613
    %v615 = vpop.f32.mrb[0].mxu0
    %v616 = vadd.f32 %v389, %v615
    %v617 = vpop.f32.mrb[0].mxu0
    %v618 = vadd.f32 %v391, %v617
    %619 = vdwg.mxu0
    %s620 = scalar_lea.vmem %s1, 64
    %v621 = vld [vmem:[%s620] sm:$0xff]
    %v622 = vld [vmem:[%s620 + $0x8] sm:$0xff]
    %v623 = vld [vmem:[%s620 + $0x10] sm:$0xff]
    %v624 = vld [vmem:[%s620 + $0x18] sm:$0x33]
    %v626 = vunpack.c.l.b16 %v106
    %v627 = vpack.c.b16 %v626, %v165
    %v632 = vunpack.c.l.b16 %v621
    %v633 = vunpack.c.h.b16 %v621
    %v634 = vunpack.c.l.b16 %v622
    %v635 = vunpack.c.h.b16 %v622
    %v636 = vunpack.c.l.b16 %v623
    %v637 = vunpack.c.h.b16 %v623
    %v638 = vunpack.c.l.b16 %v624
    %v639 = vunpack.c.h.b16 %v624
    %v640 = vpack.c.b16 %v634, %v632
    %v641 = vpack.c.b16 %v635, %v633
    %v642 = vpack.c.b16 %v638, %v636
    %v643 = vpack.c.b16 %v639, %v637
    %v647 = vsel %vm196, %v627, 0
    %v650 = vsel %vm233, %v642, 0
    %v653 = vsel %vm233, %v643, 0
    %655 = vmatprep.subr.bf16.mxu0 %v641
    %656 = vmatpush1.bf16.msra.mxu0 %v640
    %657 = vmatprep.subr.bf16.mxu0 %v653
    %658 = vmatpush1.bf16.msra.mxu0 %v650
    %659 = vmatprep.subr.bf16.mxu0 0
    %660 = vmatpush1.bf16.msra.mxu0 0
    %661 = vmatprep.subr.bf16.mxu0 0
    %662 = vmatpush1.bf16.msra.mxu0 0
    %663 = vmatprep.subr.bf16.mxu0 0
    %664 = vmatpush1.bf16.msra.mxu0 0
    %665 = vmatprep.subr.bf16.mxu0 0
    %666 = vmatpush1.bf16.msra.mxu0 0
    %667 = vmatprep.subr.bf16.mxu0 0
    %668 = vmatpush1.bf16.msra.mxu0 0
    %669 = vmatprep.subr.bf16.mxu0 0
    %670 = vmatpush1.bf16.msra.mxu0 0
    %671 = vmatprep.subr.bf16.mxu0 0
    %672 = vmatpush1.bf16.msra.mxu0 0
    %673 = vmatprep.subr.bf16.mxu0 0
    %674 = vmatpush1.bf16.msra.mxu0 0
    %675 = vmatprep.subr.bf16.mxu0 0
    %676 = vmatpush1.bf16.msra.mxu0 0
    %677 = vmatprep.subr.bf16.mxu0 0
    %678 = vmatpush1.bf16.msra.mxu0 0
    %679 = vmatprep.subr.bf16.mxu0 0
    %680 = vmatpush1.bf16.msra.mxu0 0
    %681 = vmatprep.subr.bf16.mxu0 0
    %682 = vmatpush1.bf16.msra.mxu0 0
    %683 = vmatprep.subr.bf16.mxu0 0
    %684 = vmatpush1.bf16.msra.mxu0 0
    %685 = vmatprep.subr.bf16.mxu0 0
    %686 = vmatpush1.bf16.msra.mxu0 0
    %687 = vmatprep.mubr.bf16.mxu0 0
    %688 = vmatmul.mubr.bf16.gmra.mrb[0].mxu0 %v429
    %v689 = vpop.f32.mrb[0].mxu0
    %v690 = vadd.f32 0.0, %v689
    %v691 = vpop.f32.mrb[0].mxu0
    %v692 = vadd.f32 0.0, %v691
    %v693 = vpop.f32.mrb[0].mxu0
    %v694 = vadd.f32 0.0, %v693
    %v695 = vpop.f32.mrb[0].mxu0
    %v696 = vadd.f32 0.0, %v695
    %697 = vmatprep.mubr.bf16.mxu0 0
    %698 = vmatmul.mubr.bf16.gmra.mrb[0].mxu0 %v432
    %v699 = vpop.f32.mrb[0].mxu0
    %v700 = vadd.f32 0.0, %v699
    %v701 = vpop.f32.mrb[0].mxu0
    %v702 = vadd.f32 0.0, %v701
    %v703 = vpop.f32.mrb[0].mxu0
    %v704 = vadd.f32 0.0, %v703
    %v705 = vpop.f32.mrb[0].mxu0
    %v706 = vadd.f32 0.0, %v705
    %707 = vmatprep.mubr.bf16.mxu0 0
    %708 = vmatmul.mubr.bf16.gmra.mrb[0].mxu0 %v435
    %v709 = vpop.f32.mrb[0].mxu0
    %v710 = vadd.f32 0.0, %v709
    %v711 = vpop.f32.mrb[0].mxu0
    %v712 = vadd.f32 0.0, %v711
    %v713 = vpop.f32.mrb[0].mxu0
    %v714 = vadd.f32 0.0, %v713
    %v715 = vpop.f32.mrb[0].mxu0
    %v716 = vadd.f32 0.0, %v715
    %717 = vmatprep.mubr.bf16.mxu0 0
    %718 = vmatmul.mubr.bf16.gmra.mrb[0].mxu0 %v438
    %v719 = vpop.f32.mrb[0].mxu0
    %v720 = vadd.f32 0.0, %v719
    %v721 = vpop.f32.mrb[0].mxu0
    %v722 = vadd.f32 0.0, %v721
    %v723 = vpop.f32.mrb[0].mxu0
    %v724 = vadd.f32 0.0, %v723
    %v725 = vpop.f32.mrb[0].mxu0
    %v726 = vadd.f32 0.0, %v725
    %727 = vmatprep.mubr.bf16.mxu0 0
    %728 = vmatmul.mubr.bf16.gmra.mrb[0].mxu0 %v441
    %v729 = vpop.f32.mrb[0].mxu0
    %v730 = vadd.f32 0.0, %v729
    %v731 = vpop.f32.mrb[0].mxu0
    %v732 = vadd.f32 0.0, %v731
    %v733 = vpop.f32.mrb[0].mxu0
    %v734 = vadd.f32 0.0, %v733
    %v735 = vpop.f32.mrb[0].mxu0
    %v736 = vadd.f32 0.0, %v735
    %737 = vmatprep.mubr.bf16.mxu0 0
    %738 = vmatmul.mubr.bf16.gmra.mrb[0].mxu0 %v444
    %v739 = vpop.f32.mrb[0].mxu0
    %v740 = vadd.f32 0.0, %v739
    %v741 = vpop.f32.mrb[0].mxu0
    %v742 = vadd.f32 0.0, %v741
    %v743 = vpop.f32.mrb[0].mxu0
    %v744 = vadd.f32 0.0, %v743
    %v745 = vpop.f32.mrb[0].mxu0
    %v746 = vadd.f32 0.0, %v745
    %747 = vmatprep.mubr.bf16.mxu0 0
    %748 = vmatmul.mubr.bf16.gmra.mrb[0].mxu0 %v447
    %v749 = vpop.f32.mrb[0].mxu0
    %v750 = vadd.f32 0.0, %v749
    %v751 = vpop.f32.mrb[0].mxu0
    %v752 = vadd.f32 0.0, %v751
    %v753 = vpop.f32.mrb[0].mxu0
    %v754 = vadd.f32 0.0, %v753
    %v755 = vpop.f32.mrb[0].mxu0
    %v756 = vadd.f32 0.0, %v755
    %757 = vmatprep.mubr.bf16.mxu0 0
    %758 = vmatmul.mubr.bf16.gmra.mrb[0].mxu0 %v450
    %v759 = vpop.f32.mrb[0].mxu0
    %v760 = vadd.f32 0.0, %v759
    %v761 = vpop.f32.mrb[0].mxu0
    %v762 = vadd.f32 0.0, %v761
    %v763 = vpop.f32.mrb[0].mxu0
    %v764 = vadd.f32 0.0, %v763
    %v765 = vpop.f32.mrb[0].mxu0
    %v766 = vadd.f32 0.0, %v765
    %767 = vmatprep.mubr.bf16.mxu0 0
    %768 = vmatmul.mubr.bf16.gmra.mrb[0].mxu0 %v453
    %v769 = vpop.f32.mrb[0].mxu0
    %v770 = vadd.f32 0.0, %v769
    %v771 = vpop.f32.mrb[0].mxu0
    %v772 = vadd.f32 0.0, %v771
    %v773 = vpop.f32.mrb[0].mxu0
    %v774 = vadd.f32 0.0, %v773
    %v775 = vpop.f32.mrb[0].mxu0
    %v776 = vadd.f32 0.0, %v775
    %777 = vmatprep.mubr.bf16.mxu0 0
    %778 = vmatmul.mubr.bf16.gmra.mrb[0].mxu0 %v456
    %v779 = vpop.f32.mrb[0].mxu0
    %v780 = vadd.f32 0.0, %v779
    %v781 = vpop.f32.mrb[0].mxu0
    %v782 = vadd.f32 0.0, %v781
    %v783 = vpop.f32.mrb[0].mxu0
    %v784 = vadd.f32 0.0, %v783
    %v785 = vpop.f32.mrb[0].mxu0
    %v786 = vadd.f32 0.0, %v785
    %787 = vmatprep.mubr.bf16.mxu0 0
    %788 = vmatmul.mubr.bf16.gmra.mrb[0].mxu0 %v459
    %v789 = vpop.f32.mrb[0].mxu0
    %v790 = vadd.f32 0.0, %v789
    %v791 = vpop.f32.mrb[0].mxu0
    %v792 = vadd.f32 0.0, %v791
    %v793 = vpop.f32.mrb[0].mxu0
    %v794 = vadd.f32 0.0, %v793
    %v795 = vpop.f32.mrb[0].mxu0
    %v796 = vadd.f32 0.0, %v795
    %797 = vmatprep.mubr.bf16.mxu0 0
    %798 = vmatmul.mubr.bf16.gmra.mrb[0].mxu0 %v647
    %v799 = vpop.f32.mrb[0].mxu0
    %v800 = vadd.f32 0.0, %v799
    %v801 = vpop.f32.mrb[0].mxu0
    %v802 = vadd.f32 0.0, %v801
    %v803 = vpop.f32.mrb[0].mxu0
    %v804 = vadd.f32 0.0, %v803
    %v805 = vpop.f32.mrb[0].mxu0
    %v806 = vadd.f32 0.0, %v805
    %807 = vdwg.mxu0
    %v808 = vadd.f32 %v502, %v690
    %v809 = vadd.f32 %v504, %v692
    %v810 = vadd.f32 %v506, %v694
    %v811 = vadd.f32 %v508, %v696
    %v812 = vadd.f32 %v512, %v700
    %v813 = vadd.f32 %v514, %v702
    %v814 = vadd.f32 %v516, %v704
    %v815 = vadd.f32 %v518, %v706
    %v816 = vadd.f32 %v522, %v710
    %v817 = vadd.f32 %v524, %v712
    %v818 = vadd.f32 %v526, %v714
    %v819 = vadd.f32 %v528, %v716
    %v820 = vadd.f32 %v532, %v720
    %v821 = vadd.f32 %v534, %v722
    %v822 = vadd.f32 %v536, %v724
    %v823 = vadd.f32 %v538, %v726
    %v824 = vadd.f32 %v542, %v730
    %v825 = vadd.f32 %v544, %v732
    %v826 = vadd.f32 %v546, %v734
    %v827 = vadd.f32 %v548, %v736
    %v828 = vadd.f32 %v552, %v740
    %v829 = vadd.f32 %v554, %v742
    %v830 = vadd.f32 %v556, %v744
    %v831 = vadd.f32 %v558, %v746
    %v832 = vadd.f32 %v562, %v750
    %v833 = vadd.f32 %v564, %v752
    %v834 = vadd.f32 %v566, %v754
    %v835 = vadd.f32 %v568, %v756
    %v836 = vadd.f32 %v572, %v760
    %v837 = vadd.f32 %v574, %v762
    %v838 = vadd.f32 %v576, %v764
    %v839 = vadd.f32 %v578, %v766
    %v840 = vadd.f32 %v582, %v770
    %v841 = vadd.f32 %v584, %v772
    %v842 = vadd.f32 %v586, %v774
    %v843 = vadd.f32 %v588, %v776
    %v844 = vadd.f32 %v592, %v780
    %v845 = vadd.f32 %v594, %v782
    %v846 = vadd.f32 %v596, %v784
    %v847 = vadd.f32 %v598, %v786
    %v848 = vadd.f32 %v602, %v790
    %v849 = vadd.f32 %v604, %v792
    %v850 = vadd.f32 %v606, %v794
    %v851 = vadd.f32 %v608, %v796
    %v852 = vadd.f32 %v612, %v800
    %v853 = vadd.f32 %v614, %v802
    %v854 = vadd.f32 %v616, %v804
    %v855 = vadd.f32 %v618, %v806
    %s856 = scalar_lea.vmem %s1, 96
    %v857 = vld [vmem:[%s856] sm:$0xff]
    %v858 = vld [vmem:[%s856 + $0x8] sm:$0xff]
    %v859 = vld [vmem:[%s856 + $0x10] sm:$0xff]
    %v860 = vld [vmem:[%s856 + $0x18] sm:$0x33]
    %v862 = vunpack.c.l.b16 %v107
    %v863 = vpack.c.b16 %v862, %v626
    %v868 = vunpack.c.l.b16 %v857
    %v869 = vunpack.c.h.b16 %v857
    %v870 = vunpack.c.l.b16 %v858
    %v871 = vunpack.c.h.b16 %v858
    %v872 = vunpack.c.l.b16 %v859
    %v873 = vunpack.c.h.b16 %v859
    %v874 = vunpack.c.l.b16 %v860
    %v875 = vunpack.c.h.b16 %v860
    %v876 = vpack.c.b16 %v870, %v868
    %v877 = vpack.c.b16 %v871, %v869
    %v878 = vpack.c.b16 %v874, %v872
    %v879 = vpack.c.b16 %v875, %v873
    %v883 = vsel %vm196, %v863, 0
    %v886 = vsel %vm233, %v878, 0
    %v889 = vsel %vm233, %v879, 0
    %891 = vmatprep.subr.bf16.mxu0 %v877
    %892 = vmatpush1.bf16.msra.mxu0 %v876
    %893 = vmatprep.subr.bf16.mxu0 %v889
    %894 = vmatpush1.bf16.msra.mxu0 %v886
    %895 = vmatprep.subr.bf16.mxu0 0
    %896 = vmatpush1.bf16.msra.mxu0 0
    %897 = vmatprep.subr.bf16.mxu0 0
    %898 = vmatpush1.bf16.msra.mxu0 0
    %899 = vmatprep.subr.bf16.mxu0 0
    %900 = vmatpush1.bf16.msra.mxu0 0
    %901 = vmatprep.subr.bf16.mxu0 0
    %902 = vmatpush1.bf16.msra.mxu0 0
    %903 = vmatprep.subr.bf16.mxu0 0
    %904 = vmatpush1.bf16.msra.mxu0 0
    %905 = vmatprep.subr.bf16.mxu0 0
    %906 = vmatpush1.bf16.msra.mxu0 0
    %907 = vmatprep.subr.bf16.mxu0 0
    %908 = vmatpush1.bf16.msra.mxu0 0
    %909 = vmatprep.subr.bf16.mxu0 0
    %910 = vmatpush1.bf16.msra.mxu0 0
    %911 = vmatprep.subr.bf16.mxu0 0
    %912 = vmatpush1.bf16.msra.mxu0 0
    %913 = vmatprep.subr.bf16.mxu0 0
    %914 = vmatpush1.bf16.msra.mxu0 0
    %915 = vmatprep.subr.bf16.mxu0 0
    %916 = vmatpush1.bf16.msra.mxu0 0
    %917 = vmatprep.subr.bf16.mxu0 0
    %918 = vmatpush1.bf16.msra.mxu0 0
    %919 = vmatprep.subr.bf16.mxu0 0
    %920 = vmatpush1.bf16.msra.mxu0 0
    %921 = vmatprep.subr.bf16.mxu0 0
    %922 = vmatpush1.bf16.msra.mxu0 0
    %923 = vmatprep.mubr.bf16.mxu0 0
    %924 = vmatmul.mubr.bf16.gmra.mrb[0].mxu0 %v201
    %v925 = vpop.f32.mrb[0].mxu0
    %v926 = vadd.f32 0.0, %v925
    %v927 = vpop.f32.mrb[0].mxu0
    %v928 = vadd.f32 0.0, %v927
    %v929 = vpop.f32.mrb[0].mxu0
    %v930 = vadd.f32 0.0, %v929
    %v931 = vpop.f32.mrb[0].mxu0
    %v932 = vadd.f32 0.0, %v931
    %933 = vmatprep.mubr.bf16.mxu0 0
    %934 = vmatmul.mubr.bf16.gmra.mrb[0].mxu0 %v204
    %v935 = vpop.f32.mrb[0].mxu0
    %v936 = vadd.f32 0.0, %v935
    %v937 = vpop.f32.mrb[0].mxu0
    %v938 = vadd.f32 0.0, %v937
    %v939 = vpop.f32.mrb[0].mxu0
    %v940 = vadd.f32 0.0, %v939
    %v941 = vpop.f32.mrb[0].mxu0
    %v942 = vadd.f32 0.0, %v941
    %943 = vmatprep.mubr.bf16.mxu0 0
    %944 = vmatmul.mubr.bf16.gmra.mrb[0].mxu0 %v207
    %v945 = vpop.f32.mrb[0].mxu0
    %v946 = vadd.f32 0.0, %v945
    %v947 = vpop.f32.mrb[0].mxu0
    %v948 = vadd.f32 0.0, %v947
    %v949 = vpop.f32.mrb[0].mxu0
    %v950 = vadd.f32 0.0, %v949
    %v951 = vpop.f32.mrb[0].mxu0
    %v952 = vadd.f32 0.0, %v951
    %953 = vmatprep.mubr.bf16.mxu0 0
    %954 = vmatmul.mubr.bf16.gmra.mrb[0].mxu0 %v210
    %v955 = vpop.f32.mrb[0].mxu0
    %v956 = vadd.f32 0.0, %v955
    %v957 = vpop.f32.mrb[0].mxu0
    %v958 = vadd.f32 0.0, %v957
    %v959 = vpop.f32.mrb[0].mxu0
    %v960 = vadd.f32 0.0, %v959
    %v961 = vpop.f32.mrb[0].mxu0
    %v962 = vadd.f32 0.0, %v961
    %963 = vmatprep.mubr.bf16.mxu0 0
    %964 = vmatmul.mubr.bf16.gmra.mrb[0].mxu0 %v213
    %v965 = vpop.f32.mrb[0].mxu0
    %v966 = vadd.f32 0.0, %v965
    %v967 = vpop.f32.mrb[0].mxu0
    %v968 = vadd.f32 0.0, %v967
    %v969 = vpop.f32.mrb[0].mxu0
    %v970 = vadd.f32 0.0, %v969
    %v971 = vpop.f32.mrb[0].mxu0
    %v972 = vadd.f32 0.0, %v971
    %973 = vmatprep.mubr.bf16.mxu0 0
    %974 = vmatmul.mubr.bf16.gmra.mrb[0].mxu0 %v216
    %v975 = vpop.f32.mrb[0].mxu0
    %v976 = vadd.f32 0.0, %v975
    %v977 = vpop.f32.mrb[0].mxu0
    %v978 = vadd.f32 0.0, %v977
    %v979 = vpop.f32.mrb[0].mxu0
    %v980 = vadd.f32 0.0, %v979
    %v981 = vpop.f32.mrb[0].mxu0
    %v982 = vadd.f32 0.0, %v981
    %983 = vmatprep.mubr.bf16.mxu0 0
    %984 = vmatmul.mubr.bf16.gmra.mrb[0].mxu0 %v219
    %v985 = vpop.f32.mrb[0].mxu0
    %v986 = vadd.f32 0.0, %v985
    %v987 = vpop.f32.mrb[0].mxu0
    %v988 = vadd.f32 0.0, %v987
    %v989 = vpop.f32.mrb[0].mxu0
    %v990 = vadd.f32 0.0, %v989
    %v991 = vpop.f32.mrb[0].mxu0
    %v992 = vadd.f32 0.0, %v991
    %993 = vmatprep.mubr.bf16.mxu0 0
    %994 = vmatmul.mubr.bf16.gmra.mrb[0].mxu0 %v222
    %v995 = vpop.f32.mrb[0].mxu0
    %v996 = vadd.f32 0.0, %v995
    %v997 = vpop.f32.mrb[0].mxu0
    %v998 = vadd.f32 0.0, %v997
    %v999 = vpop.f32.mrb[0].mxu0
    %v1000 = vadd.f32 0.0, %v999
    %v1001 = vpop.f32.mrb[0].mxu0
    %v1002 = vadd.f32 0.0, %v1001
    %1003 = vmatprep.mubr.bf16.mxu0 0
    %1004 = vmatmul.mubr.bf16.gmra.mrb[0].mxu0 %v225
    %v1005 = vpop.f32.mrb[0].mxu0
    %v1006 = vadd.f32 0.0, %v1005
    %v1007 = vpop.f32.mrb[0].mxu0
    %v1008 = vadd.f32 0.0, %v1007
    %v1009 = vpop.f32.mrb[0].mxu0
    %v1010 = vadd.f32 0.0, %v1009
    %v1011 = vpop.f32.mrb[0].mxu0
    %v1012 = vadd.f32 0.0, %v1011
    %1013 = vmatprep.mubr.bf16.mxu0 0
    %1014 = vmatmul.mubr.bf16.gmra.mrb[0].mxu0 %v228
    %v1015 = vpop.f32.mrb[0].mxu0
    %v1016 = vadd.f32 0.0, %v1015
    %v1017 = vpop.f32.mrb[0].mxu0
    %v1018 = vadd.f32 0.0, %v1017
    %v1019 = vpop.f32.mrb[0].mxu0
    %v1020 = vadd.f32 0.0, %v1019
    %v1021 = vpop.f32.mrb[0].mxu0
    %v1022 = vadd.f32 0.0, %v1021
    %1023 = vmatprep.mubr.bf16.mxu0 0
    %1024 = vmatmul.mubr.bf16.gmra.mrb[0].mxu0 %v231
    %v1025 = vpop.f32.mrb[0].mxu0
    %v1026 = vadd.f32 0.0, %v1025
    %v1027 = vpop.f32.mrb[0].mxu0
    %v1028 = vadd.f32 0.0, %v1027
    %v1029 = vpop.f32.mrb[0].mxu0
    %v1030 = vadd.f32 0.0, %v1029
    %v1031 = vpop.f32.mrb[0].mxu0
    %v1032 = vadd.f32 0.0, %v1031
    %1033 = vmatprep.mubr.bf16.mxu0 0
    %1034 = vmatmul.mubr.bf16.gmra.mrb[0].mxu0 %v883
    %v1035 = vpop.f32.mrb[0].mxu0
    %v1036 = vadd.f32 0.0, %v1035
    %v1037 = vpop.f32.mrb[0].mxu0
    %v1038 = vadd.f32 0.0, %v1037
    %v1039 = vpop.f32.mrb[0].mxu0
    %v1040 = vadd.f32 0.0, %v1039
    %v1041 = vpop.f32.mrb[0].mxu0
    %v1042 = vadd.f32 0.0, %v1041
    %1043 = vdwg.mxu0
    %v1044 = vadd.f32 %v808, %v926
    %v1045 = vadd.f32 %v809, %v928
    %v1046 = vadd.f32 %v810, %v930
    %v1047 = vadd.f32 %v811, %v932
    %v1048 = vadd.f32 %v812, %v936
    %v1049 = vadd.f32 %v813, %v938
    %v1050 = vadd.f32 %v814, %v940
    %v1051 = vadd.f32 %v815, %v942
    %v1052 = vadd.f32 %v816, %v946
    %v1053 = vadd.f32 %v817, %v948
    %v1054 = vadd.f32 %v818, %v950
    %v1055 = vadd.f32 %v819, %v952
    %v1056 = vadd.f32 %v820, %v956
    %v1057 = vadd.f32 %v821, %v958
    %v1058 = vadd.f32 %v822, %v960
    %v1059 = vadd.f32 %v823, %v962
    %v1060 = vadd.f32 %v824, %v966
    %v1061 = vadd.f32 %v825, %v968
    %v1062 = vadd.f32 %v826, %v970
    %v1063 = vadd.f32 %v827, %v972
    %v1064 = vadd.f32 %v828, %v976
    %v1065 = vadd.f32 %v829, %v978
    %v1066 = vadd.f32 %v830, %v980
    %v1067 = vadd.f32 %v831, %v982
    %v1068 = vadd.f32 %v832, %v986
    %v1069 = vadd.f32 %v833, %v988
    %v1070 = vadd.f32 %v834, %v990
    %v1071 = vadd.f32 %v835, %v992
    %v1072 = vadd.f32 %v836, %v996
    %v1073 = vadd.f32 %v837, %v998
    %v1074 = vadd.f32 %v838, %v1000
    %v1075 = vadd.f32 %v839, %v1002
    %v1076 = vadd.f32 %v840, %v1006
    %v1077 = vadd.f32 %v841, %v1008
    %v1078 = vadd.f32 %v842, %v1010
    %v1079 = vadd.f32 %v843, %v1012
    %v1080 = vadd.f32 %v844, %v1016
    %v1081 = vadd.f32 %v845, %v1018
    %v1082 = vadd.f32 %v846, %v1020
    %v1083 = vadd.f32 %v847, %v1022
    %v1084 = vadd.f32 %v848, %v1026
    %v1085 = vadd.f32 %v849, %v1028
    %v1086 = vadd.f32 %v850, %v1030
    %v1087 = vadd.f32 %v851, %v1032
    %v1088 = vadd.f32 %v852, %v1036
    %v1089 = vadd.f32 %v853, %v1038
    %v1090 = vadd.f32 %v854, %v1040
    %v1091 = vadd.f32 %v855, %v1042
    %s1092 = scalar_lea.vmem %s1, 128
    %v1093 = vld [vmem:[%s1092] sm:$0xff]
    %v1094 = vld [vmem:[%s1092 + $0x8] sm:$0xff]
    %v1095 = vld [vmem:[%s1092 + $0x10] sm:$0xff]
    %v1096 = vld [vmem:[%s1092 + $0x18] sm:$0x33]
    %v1098 = vunpack.c.l.b16 %v108
    %v1099 = vpack.c.b16 %v1098, %v862
    %v1104 = vunpack.c.l.b16 %v1093
    %v1105 = vunpack.c.h.b16 %v1093
    %v1106 = vunpack.c.l.b16 %v1094
    %v1107 = vunpack.c.h.b16 %v1094
    %v1108 = vunpack.c.l.b16 %v1095
    %v1109 = vunpack.c.h.b16 %v1095
    %v1110 = vunpack.c.l.b16 %v1096
    %v1111 = vunpack.c.h.b16 %v1096
    %v1112 = vpack.c.b16 %v1106, %v1104
    %v1113 = vpack.c.b16 %v1107, %v1105
    %v1114 = vpack.c.b16 %v1110, %v1108
    %v1115 = vpack.c.b16 %v1111, %v1109
    %v1119 = vsel %vm196, %v1099, 0
    %v1122 = vsel %vm233, %v1114, 0
    %v1125 = vsel %vm233, %v1115, 0
    %1127 = vmatprep.subr.bf16.mxu0 %v1113
    %1128 = vmatpush1.bf16.msra.mxu0 %v1112
    %1129 = vmatprep.subr.bf16.mxu0 %v1125
    %1130 = vmatpush1.bf16.msra.mxu0 %v1122
    %1131 = vmatprep.subr.bf16.mxu0 0
    %1132 = vmatpush1.bf16.msra.mxu0 0
    %1133 = vmatprep.subr.bf16.mxu0 0
    %1134 = vmatpush1.bf16.msra.mxu0 0
    %1135 = vmatprep.subr.bf16.mxu0 0
    %1136 = vmatpush1.bf16.msra.mxu0 0
    %1137 = vmatprep.subr.bf16.mxu0 0
    %1138 = vmatpush1.bf16.msra.mxu0 0
    %1139 = vmatprep.subr.bf16.mxu0 0
    %1140 = vmatpush1.bf16.msra.mxu0 0
    %1141 = vmatprep.subr.bf16.mxu0 0
    %1142 = vmatpush1.bf16.msra.mxu0 0
    %1143 = vmatprep.subr.bf16.mxu0 0
    %1144 = vmatpush1.bf16.msra.mxu0 0
    %1145 = vmatprep.subr.bf16.mxu0 0
    %1146 = vmatpush1.bf16.msra.mxu0 0
    %1147 = vmatprep.subr.bf16.mxu0 0
    %1148 = vmatpush1.bf16.msra.mxu0 0
    %1149 = vmatprep.subr.bf16.mxu0 0
    %1150 = vmatpush1.bf16.msra.mxu0 0
    %1151 = vmatprep.subr.bf16.mxu0 0
    %1152 = vmatpush1.bf16.msra.mxu0 0
    %1153 = vmatprep.subr.bf16.mxu0 0
    %1154 = vmatpush1.bf16.msra.mxu0 0
    %1155 = vmatprep.subr.bf16.mxu0 0
    %1156 = vmatpush1.bf16.msra.mxu0 0
    %1157 = vmatprep.subr.bf16.mxu0 0
    %1158 = vmatpush1.bf16.msra.mxu0 0
    %1159 = vmatprep.mubr.bf16.mxu0 0
    %1160 = vmatmul.mubr.bf16.gmra.mrb[0].mxu0 %v432
    %v1161 = vpop.f32.mrb[0].mxu0
    %v1162 = vadd.f32 0.0, %v1161
    %v1163 = vpop.f32.mrb[0].mxu0
    %v1164 = vadd.f32 0.0, %v1163
    %v1165 = vpop.f32.mrb[0].mxu0
    %v1166 = vadd.f32 0.0, %v1165
    %v1167 = vpop.f32.mrb[0].mxu0
    %v1168 = vadd.f32 0.0, %v1167
    %1169 = vmatprep.mubr.bf16.mxu0 0
    %1170 = vmatmul.mubr.bf16.gmra.mrb[0].mxu0 %v435
    %v1171 = vpop.f32.mrb[0].mxu0
    %v1172 = vadd.f32 0.0, %v1171
    %v1173 = vpop.f32.mrb[0].mxu0
    %v1174 = vadd.f32 0.0, %v1173
    %v1175 = vpop.f32.mrb[0].mxu0
    %v1176 = vadd.f32 0.0, %v1175
    %v1177 = vpop.f32.mrb[0].mxu0
    %v1178 = vadd.f32 0.0, %v1177
    %1179 = vmatprep.mubr.bf16.mxu0 0
    %1180 = vmatmul.mubr.bf16.gmra.mrb[0].mxu0 %v438
    %v1181 = vpop.f32.mrb[0].mxu0
    %v1182 = vadd.f32 0.0, %v1181
    %v1183 = vpop.f32.mrb[0].mxu0
    %v1184 = vadd.f32 0.0, %v1183
    %v1185 = vpop.f32.mrb[0].mxu0
    %v1186 = vadd.f32 0.0, %v1185
    %v1187 = vpop.f32.mrb[0].mxu0
    %v1188 = vadd.f32 0.0, %v1187
    %1189 = vmatprep.mubr.bf16.mxu0 0
    %1190 = vmatmul.mubr.bf16.gmra.mrb[0].mxu0 %v441
    %v1191 = vpop.f32.mrb[0].mxu0
    %v1192 = vadd.f32 0.0, %v1191
    %v1193 = vpop.f32.mrb[0].mxu0
    %v1194 = vadd.f32 0.0, %v1193
    %v1195 = vpop.f32.mrb[0].mxu0
    %v1196 = vadd.f32 0.0, %v1195
    %v1197 = vpop.f32.mrb[0].mxu0
    %v1198 = vadd.f32 0.0, %v1197
    %1199 = vmatprep.mubr.bf16.mxu0 0
    %1200 = vmatmul.mubr.bf16.gmra.mrb[0].mxu0 %v444
    %v1201 = vpop.f32.mrb[0].mxu0
    %v1202 = vadd.f32 0.0, %v1201
    %v1203 = vpop.f32.mrb[0].mxu0
    %v1204 = vadd.f32 0.0, %v1203
    %v1205 = vpop.f32.mrb[0].mxu0
    %v1206 = vadd.f32 0.0, %v1205
    %v1207 = vpop.f32.mrb[0].mxu0
    %v1208 = vadd.f32 0.0, %v1207
    %1209 = vmatprep.mubr.bf16.mxu0 0
    %1210 = vmatmul.mubr.bf16.gmra.mrb[0].mxu0 %v447
    %v1211 = vpop.f32.mrb[0].mxu0
    %v1212 = vadd.f32 0.0, %v1211
    %v1213 = vpop.f32.mrb[0].mxu0
    %v1214 = vadd.f32 0.0, %v1213
    %v1215 = vpop.f32.mrb[0].mxu0
    %v1216 = vadd.f32 0.0, %v1215
    %v1217 = vpop.f32.mrb[0].mxu0
    %v1218 = vadd.f32 0.0, %v1217
    %1219 = vmatprep.mubr.bf16.mxu0 0
    %1220 = vmatmul.mubr.bf16.gmra.mrb[0].mxu0 %v450
    %v1221 = vpop.f32.mrb[0].mxu0
    %v1222 = vadd.f32 0.0, %v1221
    %v1223 = vpop.f32.mrb[0].mxu0
    %v1224 = vadd.f32 0.0, %v1223
    %v1225 = vpop.f32.mrb[0].mxu0
    %v1226 = vadd.f32 0.0, %v1225
    %v1227 = vpop.f32.mrb[0].mxu0
    %v1228 = vadd.f32 0.0, %v1227
    %1229 = vmatprep.mubr.bf16.mxu0 0
    %1230 = vmatmul.mubr.bf16.gmra.mrb[0].mxu0 %v453
    %v1231 = vpop.f32.mrb[0].mxu0
    %v1232 = vadd.f32 0.0, %v1231
    %v1233 = vpop.f32.mrb[0].mxu0
    %v1234 = vadd.f32 0.0, %v1233
    %v1235 = vpop.f32.mrb[0].mxu0
    %v1236 = vadd.f32 0.0, %v1235
    %v1237 = vpop.f32.mrb[0].mxu0
    %v1238 = vadd.f32 0.0, %v1237
    %1239 = vmatprep.mubr.bf16.mxu0 0
    %1240 = vmatmul.mubr.bf16.gmra.mrb[0].mxu0 %v456
    %v1241 = vpop.f32.mrb[0].mxu0
    %v1242 = vadd.f32 0.0, %v1241
    %v1243 = vpop.f32.mrb[0].mxu0
    %v1244 = vadd.f32 0.0, %v1243
    %v1245 = vpop.f32.mrb[0].mxu0
    %v1246 = vadd.f32 0.0, %v1245
    %v1247 = vpop.f32.mrb[0].mxu0
    %v1248 = vadd.f32 0.0, %v1247
    %1249 = vmatprep.mubr.bf16.mxu0 0
    %1250 = vmatmul.mubr.bf16.gmra.mrb[0].mxu0 %v459
    %v1251 = vpop.f32.mrb[0].mxu0
    %v1252 = vadd.f32 0.0, %v1251
    %v1253 = vpop.f32.mrb[0].mxu0
    %v1254 = vadd.f32 0.0, %v1253
    %v1255 = vpop.f32.mrb[0].mxu0
    %v1256 = vadd.f32 0.0, %v1255
    %v1257 = vpop.f32.mrb[0].mxu0
    %v1258 = vadd.f32 0.0, %v1257
    %1259 = vmatprep.mubr.bf16.mxu0 0
    %1260 = vmatmul.mubr.bf16.gmra.mrb[0].mxu0 %v647
    %v1261 = vpop.f32.mrb[0].mxu0
    %v1262 = vadd.f32 0.0, %v1261
    %v1263 = vpop.f32.mrb[0].mxu0
    %v1264 = vadd.f32 0.0, %v1263
    %v1265 = vpop.f32.mrb[0].mxu0
    %v1266 = vadd.f32 0.0, %v1265
    %v1267 = vpop.f32.mrb[0].mxu0
    %v1268 = vadd.f32 0.0, %v1267
    %1269 = vmatprep.mubr.bf16.mxu0 0
    %1270 = vmatmul.mubr.bf16.gmra.mrb[0].mxu0 %v1119
    %v1271 = vpop.f32.mrb[0].mxu0
    %v1272 = vadd.f32 0.0, %v1271
    %v1273 = vpop.f32.mrb[0].mxu0
    %v1274 = vadd.f32 0.0, %v1273
    %v1275 = vpop.f32.mrb[0].mxu0
    %v1276 = vadd.f32 0.0, %v1275
    %v1277 = vpop.f32.mrb[0].mxu0
    %v1278 = vadd.f32 0.0, %v1277
    %1279 = vdwg.mxu0
    %v1280 = vadd.f32 %v1044, %v1162
    %v1281 = vadd.f32 %v1045, %v1164
    %v1282 = vadd.f32 %v1046, %v1166
    %v1283 = vadd.f32 %v1047, %v1168
    %v1284 = vadd.f32 %v1048, %v1172
    %v1285 = vadd.f32 %v1049, %v1174
    %v1286 = vadd.f32 %v1050, %v1176
    %v1287 = vadd.f32 %v1051, %v1178
    %v1288 = vadd.f32 %v1052, %v1182
    %v1289 = vadd.f32 %v1053, %v1184
    %v1290 = vadd.f32 %v1054, %v1186
    %v1291 = vadd.f32 %v1055, %v1188
    %v1292 = vadd.f32 %v1056, %v1192
    %v1293 = vadd.f32 %v1057, %v1194
    %v1294 = vadd.f32 %v1058, %v1196
    %v1295 = vadd.f32 %v1059, %v1198
    %v1296 = vadd.f32 %v1060, %v1202
    %v1297 = vadd.f32 %v1061, %v1204
    %v1298 = vadd.f32 %v1062, %v1206
    %v1299 = vadd.f32 %v1063, %v1208
    %v1300 = vadd.f32 %v1064, %v1212
    %v1301 = vadd.f32 %v1065, %v1214
    %v1302 = vadd.f32 %v1066, %v1216
    %v1303 = vadd.f32 %v1067, %v1218
    %v1304 = vadd.f32 %v1068, %v1222
    %v1305 = vadd.f32 %v1069, %v1224
    %v1306 = vadd.f32 %v1070, %v1226
    %v1307 = vadd.f32 %v1071, %v1228
    %v1308 = vadd.f32 %v1072, %v1232
    %v1309 = vadd.f32 %v1073, %v1234
    %v1310 = vadd.f32 %v1074, %v1236
    %v1311 = vadd.f32 %v1075, %v1238
    %v1312 = vadd.f32 %v1076, %v1242
    %v1313 = vadd.f32 %v1077, %v1244
    %v1314 = vadd.f32 %v1078, %v1246
    %v1315 = vadd.f32 %v1079, %v1248
    %v1316 = vadd.f32 %v1080, %v1252
    %v1317 = vadd.f32 %v1081, %v1254
    %v1318 = vadd.f32 %v1082, %v1256
    %v1319 = vadd.f32 %v1083, %v1258
    %v1320 = vadd.f32 %v1084, %v1262
    %v1321 = vadd.f32 %v1085, %v1264
    %v1322 = vadd.f32 %v1086, %v1266
    %v1323 = vadd.f32 %v1087, %v1268
    %v1324 = vadd.f32 %v1088, %v1272
    %v1325 = vadd.f32 %v1089, %v1274
    %v1326 = vadd.f32 %v1090, %v1276
    %v1327 = vadd.f32 %v1091, %v1278
    %v1328 = vld [vmem:[%s2] sm:$0x3]
    %v1330 = vlaneseq
    %v1331 = vshrl.u32 %v1330, 7
    %v1332 = vsub.s32 0, %v1331
    %v1333 = vrot.slane %v1328, %v1332
    %v1334 = vlaneseq
    %v1335 = vshrl.u32 %v1334, 7
    %v1336 = vsub.s32 1, %v1335
    %v1337 = vrot.slane %v1328, %v1336
    %v1340 = vadd.f32 %v1280, %v1333
    %v1341 = vadd.f32 %v1281, %v1337
    %v1342 = vadd.f32 %v1282, %v1333
    %v1343 = vadd.f32 %v1283, %v1337
    %v1344 = vadd.f32 %v1284, %v1333
    %v1345 = vadd.f32 %v1285, %v1337
    %v1346 = vadd.f32 %v1286, %v1333
    %v1347 = vadd.f32 %v1287, %v1337
    %v1348 = vadd.f32 %v1288, %v1333
    %v1349 = vadd.f32 %v1289, %v1337
    %v1350 = vadd.f32 %v1290, %v1333
    %v1351 = vadd.f32 %v1291, %v1337
    %v1352 = vadd.f32 %v1292, %v1333
    %v1353 = vadd.f32 %v1293, %v1337
    %v1354 = vadd.f32 %v1294, %v1333
    %v1355 = vadd.f32 %v1295, %v1337
    %v1356 = vadd.f32 %v1296, %v1333
    %v1357 = vadd.f32 %v1297, %v1337
    %v1358 = vadd.f32 %v1298, %v1333
    %v1359 = vadd.f32 %v1299, %v1337
    %v1360 = vadd.f32 %v1300, %v1333
    %v1361 = vadd.f32 %v1301, %v1337
    %v1362 = vadd.f32 %v1302, %v1333
    %v1363 = vadd.f32 %v1303, %v1337
    %v1364 = vadd.f32 %v1304, %v1333
    %v1365 = vadd.f32 %v1305, %v1337
    %v1366 = vadd.f32 %v1306, %v1333
    %v1367 = vadd.f32 %v1307, %v1337
    %v1368 = vadd.f32 %v1308, %v1333
    %v1369 = vadd.f32 %v1309, %v1337
    %v1370 = vadd.f32 %v1310, %v1333
    %v1371 = vadd.f32 %v1311, %v1337
    %v1372 = vadd.f32 %v1312, %v1333
    %v1373 = vadd.f32 %v1313, %v1337
    %v1374 = vadd.f32 %v1314, %v1333
    %v1375 = vadd.f32 %v1315, %v1337
    %v1376 = vadd.f32 %v1316, %v1333
    %v1377 = vadd.f32 %v1317, %v1337
    %v1378 = vadd.f32 %v1318, %v1333
    %v1379 = vadd.f32 %v1319, %v1337
    %v1380 = vadd.f32 %v1320, %v1333
    %v1381 = vadd.f32 %v1321, %v1337
    %v1382 = vadd.f32 %v1322, %v1333
    %v1383 = vadd.f32 %v1323, %v1337
    %v1384 = vadd.f32 %v1324, %v1333
    %v1385 = vadd.f32 %v1325, %v1337
    %v1386 = vadd.f32 %v1326, %v1333
    %v1387 = vadd.f32 %v1327, %v1337
    %v1388 = vmax.f32 %v1340, 0.0
    %v1389 = vmax.f32 %v1341, 0.0
    %v1390 = vmax.f32 %v1342, 0.0
    %v1391 = vmax.f32 %v1343, 0.0
    %v1392 = vmax.f32 %v1344, 0.0
    %v1393 = vmax.f32 %v1345, 0.0
    %v1394 = vmax.f32 %v1346, 0.0
    %v1395 = vmax.f32 %v1347, 0.0
    %v1396 = vmax.f32 %v1348, 0.0
    %v1397 = vmax.f32 %v1349, 0.0
    %v1398 = vmax.f32 %v1350, 0.0
    %v1399 = vmax.f32 %v1351, 0.0
    %v1400 = vmax.f32 %v1352, 0.0
    %v1401 = vmax.f32 %v1353, 0.0
    %v1402 = vmax.f32 %v1354, 0.0
    %v1403 = vmax.f32 %v1355, 0.0
    %v1404 = vmax.f32 %v1356, 0.0
    %v1405 = vmax.f32 %v1357, 0.0
    %v1406 = vmax.f32 %v1358, 0.0
    %v1407 = vmax.f32 %v1359, 0.0
    %v1408 = vmax.f32 %v1360, 0.0
    %v1409 = vmax.f32 %v1361, 0.0
    %v1410 = vmax.f32 %v1362, 0.0
    %v1411 = vmax.f32 %v1363, 0.0
    %v1412 = vmax.f32 %v1364, 0.0
    %v1413 = vmax.f32 %v1365, 0.0
    %v1414 = vmax.f32 %v1366, 0.0
    %v1415 = vmax.f32 %v1367, 0.0
    %v1416 = vmax.f32 %v1368, 0.0
    %v1417 = vmax.f32 %v1369, 0.0
    %v1418 = vmax.f32 %v1370, 0.0
    %v1419 = vmax.f32 %v1371, 0.0
    %v1420 = vmax.f32 %v1372, 0.0
    %v1421 = vmax.f32 %v1373, 0.0
    %v1422 = vmax.f32 %v1374, 0.0
    %v1423 = vmax.f32 %v1375, 0.0
    %v1424 = vmax.f32 %v1376, 0.0
    %v1425 = vmax.f32 %v1377, 0.0
    %v1426 = vmax.f32 %v1378, 0.0
    %v1427 = vmax.f32 %v1379, 0.0
    %v1428 = vmax.f32 %v1380, 0.0
    %v1429 = vmax.f32 %v1381, 0.0
    %v1430 = vmax.f32 %v1382, 0.0
    %v1431 = vmax.f32 %v1383, 0.0
    %v1432 = vmax.f32 %v1384, 0.0
    %v1433 = vmax.f32 %v1385, 0.0
    %v1434 = vmax.f32 %v1386, 0.0
    %v1435 = vmax.f32 %v1387, 0.0
    %v1436 = vmax.f32 %v1388, %v1390
    %v1437 = vmax.f32 %v1389, %v1391
    %v1438 = vmax.f32 %v1392, %v1394
    %v1439 = vmax.f32 %v1393, %v1395
    %v1440 = vmax.f32 %v1396, %v1398
    %v1441 = vmax.f32 %v1397, %v1399
    %v1442 = vmax.f32 %v1400, %v1402
    %v1443 = vmax.f32 %v1401, %v1403
    %v1444 = vmax.f32 %v1404, %v1406
    %v1445 = vmax.f32 %v1405, %v1407
    %v1446 = vmax.f32 %v1408, %v1410
    %v1447 = vmax.f32 %v1409, %v1411
    %v1448 = vmax.f32 %v1412, %v1414
    %v1449 = vmax.f32 %v1413, %v1415
    %v1450 = vmax.f32 %v1416, %v1418
    %v1451 = vmax.f32 %v1417, %v1419
    %v1452 = vmax.f32 %v1420, %v1422
    %v1453 = vmax.f32 %v1421, %v1423
    %v1454 = vmax.f32 %v1424, %v1426
    %v1455 = vmax.f32 %v1425, %v1427
    %v1456 = vmax.f32 %v1428, %v1430
    %v1457 = vmax.f32 %v1429, %v1431
    %v1458 = vmax.f32 %v1432, %v1434
    %v1459 = vmax.f32 %v1433, %v1435
    %v1460 = vmax.f32 %v1436, %v1437
    %v1461 = vmax.f32 %v1438, %v1439
    %v1462 = vmax.f32 %v1440, %v1441
    %v1463 = vmax.f32 %v1442, %v1443
    %v1464 = vmax.f32 %v1444, %v1445
    %v1465 = vmax.f32 %v1446, %v1447
    %v1466 = vmax.f32 %v1448, %v1449
    %v1467 = vmax.f32 %v1450, %v1451
    %v1468 = vmax.f32 %v1452, %v1453
    %v1469 = vmax.f32 %v1454, %v1455
    %v1470 = vmax.f32 %v1456, %v1457
    %v1471 = vmax.f32 %v1458, %v1459
    %v1472 = vpack.c.bf16 %v1461, %v1460
    %v1473 = vpack.c.bf16 %v1463, %v1462
    %v1474 = vpack.c.bf16 %v1465, %v1464
    %v1475 = vpack.c.bf16 %v1467, %v1466
    %v1476 = vpack.c.bf16 %v1469, %v1468
    %v1477 = vpack.c.bf16 %v1471, %v1470
    %v1484 = vunpack.c.l.b16 %v1472
    %v1485 = vunpack.c.h.b16 %v1472
    %v1486 = vunpack.c.l.b16 %v1473
    %v1487 = vunpack.c.h.b16 %v1473
    %v1488 = vunpack.c.l.b16 %v1474
    %v1489 = vunpack.c.h.b16 %v1474
    %v1490 = vunpack.c.l.b16 %v1475
    %v1491 = vunpack.c.h.b16 %v1475
    %v1492 = vunpack.c.l.b16 %v1476
    %v1493 = vunpack.c.h.b16 %v1476
    %v1494 = vunpack.c.l.b16 %v1477
    %v1495 = vunpack.c.h.b16 %v1477
    %v1496 = vld [vmem:[%s3] sm:$0xf]
    %v1497 = vld [vmem:[%s3 + $0x4] sm:$0xf]
    %v1498 = vld [vmem:[%s3 + $0x8] sm:$0xf]
    %v1499 = vld [vmem:[%s3 + $0xc] sm:$0xf]
    %v1500 = vld [vmem:[%s3 + $0x10] sm:$0xf]
    %v1501 = vld [vmem:[%s3 + $0x14] sm:$0xf]
    %v1502 = vld [vmem:[%s3 + $0x18] sm:$0xf]
    %v1503 = vld [vmem:[%s3 + $0x1c] sm:$0xf]
    %v1504 = vld [vmem:[%s3 + $0x20] sm:$0xf]
    %v1505 = vld [vmem:[%s3 + $0x24] sm:$0xf]
    %v1506 = vld [vmem:[%s3 + $0x28] sm:$0xf]
    %v1507 = vld [vmem:[%s3 + $0x2c] sm:$0xf]
    %v1508 = vld [vmem:[%s3 + $0x30] sm:$0xf]
    %v1509 = vld [vmem:[%s3 + $0x34] sm:$0xf]
    %v1510 = vld [vmem:[%s3 + $0x38] sm:$0xf]
    %v1511 = vld [vmem:[%s3 + $0x3c] sm:$0xf]
    %s1512 = scalar_lea.vmem %s3, 64
    %v1513 = vld [vmem:[%s1512] sm:$0xf]
    %v1514 = vld [vmem:[%s1512 + $0x4] sm:$0xf]
    %v1515 = vld [vmem:[%s1512 + $0x8] sm:$0xf]
    %v1516 = vld [vmem:[%s1512 + $0xc] sm:$0xf]
    %v1517 = vld [vmem:[%s1512 + $0x10] sm:$0xf]
    %v1518 = vld [vmem:[%s1512 + $0x14] sm:$0xf]
    %v1519 = vld [vmem:[%s1512 + $0x18] sm:$0xf]
    %v1520 = vld [vmem:[%s1512 + $0x1c] sm:$0xf]
    %v1521 = vld [vmem:[%s1512 + $0x20] sm:$0xf]
    %v1522 = vld [vmem:[%s1512 + $0x24] sm:$0xf]
    %v1523 = vld [vmem:[%s1512 + $0x28] sm:$0xf]
    %v1524 = vld [vmem:[%s1512 + $0x2c] sm:$0xf]
    %v1525 = vld [vmem:[%s1512 + $0x30] sm:$0xf]
    %v1526 = vld [vmem:[%s1512 + $0x34] sm:$0xf]
    %v1527 = vld [vmem:[%s1512 + $0x38] sm:$0xf]
    %v1528 = vld [vmem:[%s1512 + $0x3c] sm:$0xf]
    %v1529 = vpack.c.b16 %v1486, %v1485
    %v1530 = vpack.c.b16 %v1488, %v1487
    %v1531 = vpack.c.b16 %v1490, %v1489
    %v1532 = vpack.c.b16 %v1492, %v1491
    %v1553 = vunpack.c.l.b16 %v1513
    %v1554 = vunpack.c.l.b16 %v1514
    %v1555 = vunpack.c.l.b16 %v1515
    %v1556 = vunpack.c.l.b16 %v1516
    %v1557 = vunpack.c.l.b16 %v1517
    %v1558 = vunpack.c.l.b16 %v1518
    %v1559 = vunpack.c.l.b16 %v1519
    %v1560 = vunpack.c.l.b16 %v1520
    %v1561 = vunpack.c.l.b16 %v1521
    %v1562 = vunpack.c.l.b16 %v1522
    %v1563 = vunpack.c.l.b16 %v1523
    %v1564 = vunpack.c.l.b16 %v1524
    %v1565 = vunpack.c.l.b16 %v1525
    %v1566 = vunpack.c.l.b16 %v1526
    %v1567 = vunpack.c.l.b16 %v1527
    %v1568 = vunpack.c.l.b16 %v1528
    %v1569 = vpack.c.b16 %v1554, %v1553
    %v1570 = vpack.c.b16 %v1556, %v1555
    %v1571 = vpack.c.b16 %v1558, %v1557
    %v1572 = vpack.c.b16 %v1560, %v1559
    %v1573 = vpack.c.b16 %v1562, %v1561
    %v1574 = vpack.c.b16 %v1564, %v1563
    %v1575 = vpack.c.b16 %v1566, %v1565
    %v1576 = vpack.c.b16 %v1568, %v1567
    %1585 = vmatprep.subr.bf16.mxu0 0
    %1586 = vmatpush1.bf16.msra.mxu0 %v1569
    %1587 = vmatprep.subr.bf16.mxu0 0
    %1588 = vmatpush1.bf16.msra.mxu0 %v1570
    %1589 = vmatprep.subr.bf16.mxu0 0
    %1590 = vmatpush1.bf16.msra.mxu0 %v1571
    %1591 = vmatprep.subr.bf16.mxu0 0
    %1592 = vmatpush1.bf16.msra.mxu0 %v1572
    %1593 = vmatprep.subr.bf16.mxu0 0
    %1594 = vmatpush1.bf16.msra.mxu0 %v1573
    %1595 = vmatprep.subr.bf16.mxu0 0
    %1596 = vmatpush1.bf16.msra.mxu0 %v1574
    %1597 = vmatprep.subr.bf16.mxu0 0
    %1598 = vmatpush1.bf16.msra.mxu0 %v1575
    %1599 = vmatprep.subr.bf16.mxu0 0
    %1600 = vmatpush1.bf16.msra.mxu0 %v1576
    %1601 = vmatprep.subr.bf16.mxu0 0
    %1602 = vmatpush1.bf16.msra.mxu0 0
    %1603 = vmatprep.subr.bf16.mxu0 0
    %1604 = vmatpush1.bf16.msra.mxu0 0
    %1605 = vmatprep.subr.bf16.mxu0 0
    %1606 = vmatpush1.bf16.msra.mxu0 0
    %1607 = vmatprep.subr.bf16.mxu0 0
    %1608 = vmatpush1.bf16.msra.mxu0 0
    %1609 = vmatprep.subr.bf16.mxu0 0
    %1610 = vmatpush1.bf16.msra.mxu0 0
    %1611 = vmatprep.subr.bf16.mxu0 0
    %1612 = vmatpush1.bf16.msra.mxu0 0
    %1613 = vmatprep.subr.bf16.mxu0 0
    %1614 = vmatpush1.bf16.msra.mxu0 0
    %1615 = vmatprep.subr.bf16.mxu0 0
    %1616 = vmatpush1.bf16.msra.mxu0 0
    %1617 = vmatprep.mubr.bf16.mxu0 0
    %1618 = vmatmul.mubr.bf16.gmra.mrb[0].mxu0 %v1529
    %v1619 = vpop.f32.mrb[0].mxu0
    %v1620 = vadd.f32 0.0, %v1619
    %v1621 = vpop.f32.mrb[0].mxu0
    %v1622 = vpop.f32.mrb[0].mxu0
    %v1623 = vadd.f32 0.0, %v1622
    %v1624 = vpop.f32.mrb[0].mxu0
    %1625 = vmatprep.mubr.bf16.mxu0 0
    %1626 = vmatmul.mubr.bf16.gmra.mrb[0].mxu0 %v1530
    %v1627 = vpop.f32.mrb[0].mxu0
    %v1628 = vadd.f32 0.0, %v1627
    %v1629 = vpop.f32.mrb[0].mxu0
    %v1630 = vpop.f32.mrb[0].mxu0
    %v1631 = vadd.f32 0.0, %v1630
    %v1632 = vpop.f32.mrb[0].mxu0
    %1633 = vmatprep.mubr.bf16.mxu0 0
    %1634 = vmatmul.mubr.bf16.gmra.mrb[0].mxu0 %v1531
    %v1635 = vpop.f32.mrb[0].mxu0
    %v1636 = vadd.f32 0.0, %v1635
    %v1637 = vpop.f32.mrb[0].mxu0
    %v1638 = vpop.f32.mrb[0].mxu0
    %v1639 = vadd.f32 0.0, %v1638
    %v1640 = vpop.f32.mrb[0].mxu0
    %1641 = vmatprep.mubr.bf16.mxu0 0
    %1642 = vmatmul.mubr.bf16.gmra.mrb[0].mxu0 %v1532
    %v1643 = vpop.f32.mrb[0].mxu0
    %v1644 = vadd.f32 0.0, %v1643
    %v1645 = vpop.f32.mrb[0].mxu0
    %v1646 = vpop.f32.mrb[0].mxu0
    %v1647 = vadd.f32 0.0, %v1646
    %v1648 = vpop.f32.mrb[0].mxu0
    %1649 = vdwg.mxu0
    %v1650 = vpack.c.b16 %v1485, %v1484
    %v1651 = vpack.c.b16 %v1487, %v1486
    %v1652 = vpack.c.b16 %v1489, %v1488
    %v1653 = vpack.c.b16 %v1491, %v1490
    %v1674 = vunpack.c.l.b16 %v1496
    %v1675 = vunpack.c.l.b16 %v1497
    %v1676 = vunpack.c.l.b16 %v1498
    %v1677 = vunpack.c.l.b16 %v1499
    %v1678 = vunpack.c.l.b16 %v1500
    %v1679 = vunpack.c.l.b16 %v1501
    %v1680 = vunpack.c.l.b16 %v1502
    %v1681 = vunpack.c.l.b16 %v1503
    %v1682 = vunpack.c.l.b16 %v1504
    %v1683 = vunpack.c.l.b16 %v1505
    %v1684 = vunpack.c.l.b16 %v1506
    %v1685 = vunpack.c.l.b16 %v1507
    %v1686 = vunpack.c.l.b16 %v1508
    %v1687 = vunpack.c.l.b16 %v1509
    %v1688 = vunpack.c.l.b16 %v1510
    %v1689 = vunpack.c.l.b16 %v1511
    %v1690 = vpack.c.b16 %v1675, %v1674
    %v1691 = vpack.c.b16 %v1677, %v1676
    %v1692 = vpack.c.b16 %v1679, %v1678
    %v1693 = vpack.c.b16 %v1681, %v1680
    %v1694 = vpack.c.b16 %v1683, %v1682
    %v1695 = vpack.c.b16 %v1685, %v1684
    %v1696 = vpack.c.b16 %v1687, %v1686
    %v1697 = vpack.c.b16 %v1689, %v1688
    %1706 = vmatprep.subr.bf16.mxu0 0
    %1707 = vmatpush1.bf16.msra.mxu0 %v1690
    %1708 = vmatprep.subr.bf16.mxu0 0
    %1709 = vmatpush1.bf16.msra.mxu0 %v1691
    %1710 = vmatprep.subr.bf16.mxu0 0
    %1711 = vmatpush1.bf16.msra.mxu0 %v1692
    %1712 = vmatprep.subr.bf16.mxu0 0
    %1713 = vmatpush1.bf16.msra.mxu0 %v1693
    %1714 = vmatprep.subr.bf16.mxu0 0
    %1715 = vmatpush1.bf16.msra.mxu0 %v1694
    %1716 = vmatprep.subr.bf16.mxu0 0
    %1717 = vmatpush1.bf16.msra.mxu0 %v1695
    %1718 = vmatprep.subr.bf16.mxu0 0
    %1719 = vmatpush1.bf16.msra.mxu0 %v1696
    %1720 = vmatprep.subr.bf16.mxu0 0
    %1721 = vmatpush1.bf16.msra.mxu0 %v1697
    %1722 = vmatprep.subr.bf16.mxu0 0
    %1723 = vmatpush1.bf16.msra.mxu0 0
    %1724 = vmatprep.subr.bf16.mxu0 0
    %1725 = vmatpush1.bf16.msra.mxu0 0
    %1726 = vmatprep.subr.bf16.mxu0 0
    %1727 = vmatpush1.bf16.msra.mxu0 0
    %1728 = vmatprep.subr.bf16.mxu0 0
    %1729 = vmatpush1.bf16.msra.mxu0 0
    %1730 = vmatprep.subr.bf16.mxu0 0
    %1731 = vmatpush1.bf16.msra.mxu0 0
    %1732 = vmatprep.subr.bf16.mxu0 0
    %1733 = vmatpush1.bf16.msra.mxu0 0
    %1734 = vmatprep.subr.bf16.mxu0 0
    %1735 = vmatpush1.bf16.msra.mxu0 0
    %1736 = vmatprep.subr.bf16.mxu0 0
    %1737 = vmatpush1.bf16.msra.mxu0 0
    %1738 = vmatprep.mubr.bf16.mxu0 0
    %1739 = vmatmul.mubr.bf16.gmra.mrb[0].mxu0 %v1650
    %v1740 = vpop.f32.mrb[0].mxu0
    %v1741 = vadd.f32 %v1620, %v1740
    %v1742 = vpop.f32.mrb[0].mxu0
    %v1743 = vpop.f32.mrb[0].mxu0
    %v1744 = vadd.f32 %v1623, %v1743
    %v1745 = vpop.f32.mrb[0].mxu0
    %1746 = vmatprep.mubr.bf16.mxu0 0
    %1747 = vmatmul.mubr.bf16.gmra.mrb[0].mxu0 %v1651
    %v1748 = vpop.f32.mrb[0].mxu0
    %v1749 = vadd.f32 %v1628, %v1748
    %v1750 = vpop.f32.mrb[0].mxu0
    %v1751 = vpop.f32.mrb[0].mxu0
    %v1752 = vadd.f32 %v1631, %v1751
    %v1753 = vpop.f32.mrb[0].mxu0
    %1754 = vmatprep.mubr.bf16.mxu0 0
    %1755 = vmatmul.mubr.bf16.gmra.mrb[0].mxu0 %v1652
    %v1756 = vpop.f32.mrb[0].mxu0
    %v1757 = vadd.f32 %v1636, %v1756
    %v1758 = vpop.f32.mrb[0].mxu0
    %v1759 = vpop.f32.mrb[0].mxu0
    %v1760 = vadd.f32 %v1639, %v1759
    %v1761 = vpop.f32.mrb[0].mxu0
    %1762 = vmatprep.mubr.bf16.mxu0 0
    %1763 = vmatmul.mubr.bf16.gmra.mrb[0].mxu0 %v1653
    %v1764 = vpop.f32.mrb[0].mxu0
    %v1765 = vadd.f32 %v1644, %v1764
    %v1766 = vpop.f32.mrb[0].mxu0
    %v1767 = vpop.f32.mrb[0].mxu0
    %v1768 = vadd.f32 %v1647, %v1767
    %v1769 = vpop.f32.mrb[0].mxu0
    %1770 = vdwg.mxu0
    %s1771 = scalar_lea.vmem %s3, 128
    %v1772 = vld [vmem:[%s1771] sm:$0xf]
    %v1773 = vld [vmem:[%s1771 + $0x4] sm:$0xf]
    %v1774 = vld [vmem:[%s1771 + $0x8] sm:$0xf]
    %v1775 = vld [vmem:[%s1771 + $0xc] sm:$0xf]
    %v1776 = vld [vmem:[%s1771 + $0x10] sm:$0xf]
    %v1777 = vld [vmem:[%s1771 + $0x14] sm:$0xf]
    %v1778 = vld [vmem:[%s1771 + $0x18] sm:$0xf]
    %v1779 = vld [vmem:[%s1771 + $0x1c] sm:$0xf]
    %v1780 = vld [vmem:[%s1771 + $0x20] sm:$0xf]
    %v1781 = vld [vmem:[%s1771 + $0x24] sm:$0xf]
    %v1782 = vld [vmem:[%s1771 + $0x28] sm:$0xf]
    %v1783 = vld [vmem:[%s1771 + $0x2c] sm:$0xf]
    %v1784 = vld [vmem:[%s1771 + $0x30] sm:$0xf]
    %v1785 = vld [vmem:[%s1771 + $0x34] sm:$0xf]
    %v1786 = vld [vmem:[%s1771 + $0x38] sm:$0xf]
    %v1787 = vld [vmem:[%s1771 + $0x3c] sm:$0xf]
    %v1788 = vpack.c.b16 %v1493, %v1492
    %v1806 = vunpack.c.l.b16 %v1772
    %v1807 = vunpack.c.l.b16 %v1773
    %v1808 = vunpack.c.l.b16 %v1774
    %v1809 = vunpack.c.l.b16 %v1775
    %v1810 = vunpack.c.l.b16 %v1776
    %v1811 = vunpack.c.l.b16 %v1777
    %v1812 = vunpack.c.l.b16 %v1778
    %v1813 = vunpack.c.l.b16 %v1779
    %v1814 = vunpack.c.l.b16 %v1780
    %v1815 = vunpack.c.l.b16 %v1781
    %v1816 = vunpack.c.l.b16 %v1782
    %v1817 = vunpack.c.l.b16 %v1783
    %v1818 = vunpack.c.l.b16 %v1784
    %v1819 = vunpack.c.l.b16 %v1785
    %v1820 = vunpack.c.l.b16 %v1786
    %v1821 = vunpack.c.l.b16 %v1787
    %v1822 = vpack.c.b16 %v1807, %v1806
    %v1823 = vpack.c.b16 %v1809, %v1808
    %v1824 = vpack.c.b16 %v1811, %v1810
    %v1825 = vpack.c.b16 %v1813, %v1812
    %v1826 = vpack.c.b16 %v1815, %v1814
    %v1827 = vpack.c.b16 %v1817, %v1816
    %v1828 = vpack.c.b16 %v1819, %v1818
    %v1829 = vpack.c.b16 %v1821, %v1820
    %1838 = vmatprep.subr.bf16.mxu0 0
    %1839 = vmatpush1.bf16.msra.mxu0 %v1822
    %1840 = vmatprep.subr.bf16.mxu0 0
    %1841 = vmatpush1.bf16.msra.mxu0 %v1823
    %1842 = vmatprep.subr.bf16.mxu0 0
    %1843 = vmatpush1.bf16.msra.mxu0 %v1824
    %1844 = vmatprep.subr.bf16.mxu0 0
    %1845 = vmatpush1.bf16.msra.mxu0 %v1825
    %1846 = vmatprep.subr.bf16.mxu0 0
    %1847 = vmatpush1.bf16.msra.mxu0 %v1826
    %1848 = vmatprep.subr.bf16.mxu0 0
    %1849 = vmatpush1.bf16.msra.mxu0 %v1827
    %1850 = vmatprep.subr.bf16.mxu0 0
    %1851 = vmatpush1.bf16.msra.mxu0 %v1828
    %1852 = vmatprep.subr.bf16.mxu0 0
    %1853 = vmatpush1.bf16.msra.mxu0 %v1829
    %1854 = vmatprep.subr.bf16.mxu0 0
    %1855 = vmatpush1.bf16.msra.mxu0 0
    %1856 = vmatprep.subr.bf16.mxu0 0
    %1857 = vmatpush1.bf16.msra.mxu0 0
    %1858 = vmatprep.subr.bf16.mxu0 0
    %1859 = vmatpush1.bf16.msra.mxu0 0
    %1860 = vmatprep.subr.bf16.mxu0 0
    %1861 = vmatpush1.bf16.msra.mxu0 0
    %1862 = vmatprep.subr.bf16.mxu0 0
    %1863 = vmatpush1.bf16.msra.mxu0 0
    %1864 = vmatprep.subr.bf16.mxu0 0
    %1865 = vmatpush1.bf16.msra.mxu0 0
    %1866 = vmatprep.subr.bf16.mxu0 0
    %1867 = vmatpush1.bf16.msra.mxu0 0
    %1868 = vmatprep.subr.bf16.mxu0 0
    %1869 = vmatpush1.bf16.msra.mxu0 0
    %1870 = vmatprep.mubr.bf16.mxu0 0
    %1871 = vmatmul.mubr.bf16.gmra.mrb[0].mxu0 %v1651
    %v1872 = vpop.f32.mrb[0].mxu0
    %v1873 = vadd.f32 0.0, %v1872
    %v1874 = vpop.f32.mrb[0].mxu0
    %v1875 = vpop.f32.mrb[0].mxu0
    %v1876 = vadd.f32 0.0, %v1875
    %v1877 = vpop.f32.mrb[0].mxu0
    %1878 = vmatprep.mubr.bf16.mxu0 0
    %1879 = vmatmul.mubr.bf16.gmra.mrb[0].mxu0 %v1652
    %v1880 = vpop.f32.mrb[0].mxu0
    %v1881 = vadd.f32 0.0, %v1880
    %v1882 = vpop.f32.mrb[0].mxu0
    %v1883 = vpop.f32.mrb[0].mxu0
    %v1884 = vadd.f32 0.0, %v1883
    %v1885 = vpop.f32.mrb[0].mxu0
    %1886 = vmatprep.mubr.bf16.mxu0 0
    %1887 = vmatmul.mubr.bf16.gmra.mrb[0].mxu0 %v1653
    %v1888 = vpop.f32.mrb[0].mxu0
    %v1889 = vadd.f32 0.0, %v1888
    %v1890 = vpop.f32.mrb[0].mxu0
    %v1891 = vpop.f32.mrb[0].mxu0
    %v1892 = vadd.f32 0.0, %v1891
    %v1893 = vpop.f32.mrb[0].mxu0
    %1894 = vmatprep.mubr.bf16.mxu0 0
    %1895 = vmatmul.mubr.bf16.gmra.mrb[0].mxu0 %v1788
    %v1896 = vpop.f32.mrb[0].mxu0
    %v1897 = vadd.f32 0.0, %v1896
    %v1898 = vpop.f32.mrb[0].mxu0
    %v1899 = vpop.f32.mrb[0].mxu0
    %v1900 = vadd.f32 0.0, %v1899
    %v1901 = vpop.f32.mrb[0].mxu0
    %1902 = vdwg.mxu0
    %v1903 = vadd.f32 %v1741, %v1873
    %v1904 = vadd.f32 %v1744, %v1876
    %v1905 = vadd.f32 %v1749, %v1881
    %v1906 = vadd.f32 %v1752, %v1884
    %v1907 = vadd.f32 %v1757, %v1889
    %v1908 = vadd.f32 %v1760, %v1892
    %v1909 = vadd.f32 %v1765, %v1897
    %v1910 = vadd.f32 %v1768, %v1900
    %s1911 = scalar_lea.vmem %s3, 192
    %v1912 = vld [vmem:[%s1911] sm:$0xf]
    %v1913 = vld [vmem:[%s1911 + $0x4] sm:$0xf]
    %v1914 = vld [vmem:[%s1911 + $0x8] sm:$0xf]
    %v1915 = vld [vmem:[%s1911 + $0xc] sm:$0xf]
    %v1916 = vld [vmem:[%s1911 + $0x10] sm:$0xf]
    %v1917 = vld [vmem:[%s1911 + $0x14] sm:$0xf]
    %v1918 = vld [vmem:[%s1911 + $0x18] sm:$0xf]
    %v1919 = vld [vmem:[%s1911 + $0x1c] sm:$0xf]
    %v1920 = vld [vmem:[%s1911 + $0x20] sm:$0xf]
    %v1921 = vld [vmem:[%s1911 + $0x24] sm:$0xf]
    %v1922 = vld [vmem:[%s1911 + $0x28] sm:$0xf]
    %v1923 = vld [vmem:[%s1911 + $0x2c] sm:$0xf]
    %v1924 = vld [vmem:[%s1911 + $0x30] sm:$0xf]
    %v1925 = vld [vmem:[%s1911 + $0x34] sm:$0xf]
    %v1926 = vld [vmem:[%s1911 + $0x38] sm:$0xf]
    %v1927 = vld [vmem:[%s1911 + $0x3c] sm:$0xf]
    %v1928 = vpack.c.b16 %v1494, %v1493
    %v1946 = vunpack.c.l.b16 %v1912
    %v1947 = vunpack.c.l.b16 %v1913
    %v1948 = vunpack.c.l.b16 %v1914
    %v1949 = vunpack.c.l.b16 %v1915
    %v1950 = vunpack.c.l.b16 %v1916
    %v1951 = vunpack.c.l.b16 %v1917
    %v1952 = vunpack.c.l.b16 %v1918
    %v1953 = vunpack.c.l.b16 %v1919
    %v1954 = vunpack.c.l.b16 %v1920
    %v1955 = vunpack.c.l.b16 %v1921
    %v1956 = vunpack.c.l.b16 %v1922
    %v1957 = vunpack.c.l.b16 %v1923
    %v1958 = vunpack.c.l.b16 %v1924
    %v1959 = vunpack.c.l.b16 %v1925
    %v1960 = vunpack.c.l.b16 %v1926
    %v1961 = vunpack.c.l.b16 %v1927
    %v1962 = vpack.c.b16 %v1947, %v1946
    %v1963 = vpack.c.b16 %v1949, %v1948
    %v1964 = vpack.c.b16 %v1951, %v1950
    %v1965 = vpack.c.b16 %v1953, %v1952
    %v1966 = vpack.c.b16 %v1955, %v1954
    %v1967 = vpack.c.b16 %v1957, %v1956
    %v1968 = vpack.c.b16 %v1959, %v1958
    %v1969 = vpack.c.b16 %v1961, %v1960
    %1978 = vmatprep.subr.bf16.mxu0 0
    %1979 = vmatpush1.bf16.msra.mxu0 %v1962
    %1980 = vmatprep.subr.bf16.mxu0 0
    %1981 = vmatpush1.bf16.msra.mxu0 %v1963
    %1982 = vmatprep.subr.bf16.mxu0 0
    %1983 = vmatpush1.bf16.msra.mxu0 %v1964
    %1984 = vmatprep.subr.bf16.mxu0 0
    %1985 = vmatpush1.bf16.msra.mxu0 %v1965
    %1986 = vmatprep.subr.bf16.mxu0 0
    %1987 = vmatpush1.bf16.msra.mxu0 %v1966
    %1988 = vmatprep.subr.bf16.mxu0 0
    %1989 = vmatpush1.bf16.msra.mxu0 %v1967
    %1990 = vmatprep.subr.bf16.mxu0 0
    %1991 = vmatpush1.bf16.msra.mxu0 %v1968
    %1992 = vmatprep.subr.bf16.mxu0 0
    %1993 = vmatpush1.bf16.msra.mxu0 %v1969
    %1994 = vmatprep.subr.bf16.mxu0 0
    %1995 = vmatpush1.bf16.msra.mxu0 0
    %1996 = vmatprep.subr.bf16.mxu0 0
    %1997 = vmatpush1.bf16.msra.mxu0 0
    %1998 = vmatprep.subr.bf16.mxu0 0
    %1999 = vmatpush1.bf16.msra.mxu0 0
    %2000 = vmatprep.subr.bf16.mxu0 0
    %2001 = vmatpush1.bf16.msra.mxu0 0
    %2002 = vmatprep.subr.bf16.mxu0 0
    %2003 = vmatpush1.bf16.msra.mxu0 0
    %2004 = vmatprep.subr.bf16.mxu0 0
    %2005 = vmatpush1.bf16.msra.mxu0 0
    %2006 = vmatprep.subr.bf16.mxu0 0
    %2007 = vmatpush1.bf16.msra.mxu0 0
    %2008 = vmatprep.subr.bf16.mxu0 0
    %2009 = vmatpush1.bf16.msra.mxu0 0
    %2010 = vmatprep.mubr.bf16.mxu0 0
    %2011 = vmatmul.mubr.bf16.gmra.mrb[0].mxu0 %v1530
    %v2012 = vpop.f32.mrb[0].mxu0
    %v2013 = vadd.f32 0.0, %v2012
    %v2014 = vpop.f32.mrb[0].mxu0
    %v2015 = vpop.f32.mrb[0].mxu0
    %v2016 = vadd.f32 0.0, %v2015
    %v2017 = vpop.f32.mrb[0].mxu0
    %2018 = vmatprep.mubr.bf16.mxu0 0
    %2019 = vmatmul.mubr.bf16.gmra.mrb[0].mxu0 %v1531
    %v2020 = vpop.f32.mrb[0].mxu0
    %v2021 = vadd.f32 0.0, %v2020
    %v2022 = vpop.f32.mrb[0].mxu0
    %v2023 = vpop.f32.mrb[0].mxu0
    %v2024 = vadd.f32 0.0, %v2023
    %v2025 = vpop.f32.mrb[0].mxu0
    %2026 = vmatprep.mubr.bf16.mxu0 0
    %2027 = vmatmul.mubr.bf16.gmra.mrb[0].mxu0 %v1532
    %v2028 = vpop.f32.mrb[0].mxu0
    %v2029 = vadd.f32 0.0, %v2028
    %v2030 = vpop.f32.mrb[0].mxu0
    %v2031 = vpop.f32.mrb[0].mxu0
    %v2032 = vadd.f32 0.0, %v2031
    %v2033 = vpop.f32.mrb[0].mxu0
    %2034 = vmatprep.mubr.bf16.mxu0 0
    %2035 = vmatmul.mubr.bf16.gmra.mrb[0].mxu0 %v1928
    %v2036 = vpop.f32.mrb[0].mxu0
    %v2037 = vadd.f32 0.0, %v2036
    %v2038 = vpop.f32.mrb[0].mxu0
    %v2039 = vpop.f32.mrb[0].mxu0
    %v2040 = vadd.f32 0.0, %v2039
    %v2041 = vpop.f32.mrb[0].mxu0
    %2042 = vdwg.mxu0
    %v2043 = vadd.f32 %v1903, %v2013
    %v2044 = vadd.f32 %v1904, %v2016
    %v2045 = vadd.f32 %v1905, %v2021
    %v2046 = vadd.f32 %v1906, %v2024
    %v2047 = vadd.f32 %v1907, %v2029
    %v2048 = vadd.f32 %v1908, %v2032
    %v2049 = vadd.f32 %v1909, %v2037
    %v2050 = vadd.f32 %v1910, %v2040
    %s2051 = scalar_lea.vmem %s3, 256
    %v2052 = vld [vmem:[%s2051] sm:$0xf]
    %v2053 = vld [vmem:[%s2051 + $0x4] sm:$0xf]
    %v2054 = vld [vmem:[%s2051 + $0x8] sm:$0xf]
    %v2055 = vld [vmem:[%s2051 + $0xc] sm:$0xf]
    %v2056 = vld [vmem:[%s2051 + $0x10] sm:$0xf]
    %v2057 = vld [vmem:[%s2051 + $0x14] sm:$0xf]
    %v2058 = vld [vmem:[%s2051 + $0x18] sm:$0xf]
    %v2059 = vld [vmem:[%s2051 + $0x1c] sm:$0xf]
    %v2060 = vld [vmem:[%s2051 + $0x20] sm:$0xf]
    %v2061 = vld [vmem:[%s2051 + $0x24] sm:$0xf]
    %v2062 = vld [vmem:[%s2051 + $0x28] sm:$0xf]
    %v2063 = vld [vmem:[%s2051 + $0x2c] sm:$0xf]
    %v2064 = vld [vmem:[%s2051 + $0x30] sm:$0xf]
    %v2065 = vld [vmem:[%s2051 + $0x34] sm:$0xf]
    %v2066 = vld [vmem:[%s2051 + $0x38] sm:$0xf]
    %v2067 = vld [vmem:[%s2051 + $0x3c] sm:$0xf]
    %v2068 = vpack.c.b16 %v1495, %v1494
    %v2086 = vunpack.c.l.b16 %v2052
    %v2087 = vunpack.c.l.b16 %v2053
    %v2088 = vunpack.c.l.b16 %v2054
    %v2089 = vunpack.c.l.b16 %v2055
    %v2090 = vunpack.c.l.b16 %v2056
    %v2091 = vunpack.c.l.b16 %v2057
    %v2092 = vunpack.c.l.b16 %v2058
    %v2093 = vunpack.c.l.b16 %v2059
    %v2094 = vunpack.c.l.b16 %v2060
    %v2095 = vunpack.c.l.b16 %v2061
    %v2096 = vunpack.c.l.b16 %v2062
    %v2097 = vunpack.c.l.b16 %v2063
    %v2098 = vunpack.c.l.b16 %v2064
    %v2099 = vunpack.c.l.b16 %v2065
    %v2100 = vunpack.c.l.b16 %v2066
    %v2101 = vunpack.c.l.b16 %v2067
    %v2102 = vpack.c.b16 %v2087, %v2086
    %v2103 = vpack.c.b16 %v2089, %v2088
    %v2104 = vpack.c.b16 %v2091, %v2090
    %v2105 = vpack.c.b16 %v2093, %v2092
    %v2106 = vpack.c.b16 %v2095, %v2094
    %v2107 = vpack.c.b16 %v2097, %v2096
    %v2108 = vpack.c.b16 %v2099, %v2098
    %v2109 = vpack.c.b16 %v2101, %v2100
    %2118 = vmatprep.subr.bf16.mxu0 0
    %2119 = vmatpush1.bf16.msra.mxu0 %v2102
    %2120 = vmatprep.subr.bf16.mxu0 0
    %2121 = vmatpush1.bf16.msra.mxu0 %v2103
    %2122 = vmatprep.subr.bf16.mxu0 0
    %2123 = vmatpush1.bf16.msra.mxu0 %v2104
    %2124 = vmatprep.subr.bf16.mxu0 0
    %2125 = vmatpush1.bf16.msra.mxu0 %v2105
    %2126 = vmatprep.subr.bf16.mxu0 0
    %2127 = vmatpush1.bf16.msra.mxu0 %v2106
    %2128 = vmatprep.subr.bf16.mxu0 0
    %2129 = vmatpush1.bf16.msra.mxu0 %v2107
    %2130 = vmatprep.subr.bf16.mxu0 0
    %2131 = vmatpush1.bf16.msra.mxu0 %v2108
    %2132 = vmatprep.subr.bf16.mxu0 0
    %2133 = vmatpush1.bf16.msra.mxu0 %v2109
    %2134 = vmatprep.subr.bf16.mxu0 0
    %2135 = vmatpush1.bf16.msra.mxu0 0
    %2136 = vmatprep.subr.bf16.mxu0 0
    %2137 = vmatpush1.bf16.msra.mxu0 0
    %2138 = vmatprep.subr.bf16.mxu0 0
    %2139 = vmatpush1.bf16.msra.mxu0 0
    %2140 = vmatprep.subr.bf16.mxu0 0
    %2141 = vmatpush1.bf16.msra.mxu0 0
    %2142 = vmatprep.subr.bf16.mxu0 0
    %2143 = vmatpush1.bf16.msra.mxu0 0
    %2144 = vmatprep.subr.bf16.mxu0 0
    %2145 = vmatpush1.bf16.msra.mxu0 0
    %2146 = vmatprep.subr.bf16.mxu0 0
    %2147 = vmatpush1.bf16.msra.mxu0 0
    %2148 = vmatprep.subr.bf16.mxu0 0
    %2149 = vmatpush1.bf16.msra.mxu0 0
    %2150 = vmatprep.mubr.bf16.mxu0 0
    %2151 = vmatmul.mubr.bf16.gmra.mrb[0].mxu0 %v1652
    %v2152 = vpop.f32.mrb[0].mxu0
    %v2153 = vadd.f32 0.0, %v2152
    %v2154 = vpop.f32.mrb[0].mxu0
    %v2155 = vpop.f32.mrb[0].mxu0
    %v2156 = vadd.f32 0.0, %v2155
    %v2157 = vpop.f32.mrb[0].mxu0
    %2158 = vmatprep.mubr.bf16.mxu0 0
    %2159 = vmatmul.mubr.bf16.gmra.mrb[0].mxu0 %v1653
    %v2160 = vpop.f32.mrb[0].mxu0
    %v2161 = vadd.f32 0.0, %v2160
    %v2162 = vpop.f32.mrb[0].mxu0
    %v2163 = vpop.f32.mrb[0].mxu0
    %v2164 = vadd.f32 0.0, %v2163
    %v2165 = vpop.f32.mrb[0].mxu0
    %2166 = vmatprep.mubr.bf16.mxu0 0
    %2167 = vmatmul.mubr.bf16.gmra.mrb[0].mxu0 %v1788
    %v2168 = vpop.f32.mrb[0].mxu0
    %v2169 = vadd.f32 0.0, %v2168
    %v2170 = vpop.f32.mrb[0].mxu0
    %v2171 = vpop.f32.mrb[0].mxu0
    %v2172 = vadd.f32 0.0, %v2171
    %v2173 = vpop.f32.mrb[0].mxu0
    %2174 = vmatprep.mubr.bf16.mxu0 0
    %2175 = vmatmul.mubr.bf16.gmra.mrb[0].mxu0 %v2068
    %v2176 = vpop.f32.mrb[0].mxu0
    %v2177 = vadd.f32 0.0, %v2176
    %v2178 = vpop.f32.mrb[0].mxu0
    %v2179 = vpop.f32.mrb[0].mxu0
    %v2180 = vadd.f32 0.0, %v2179
    %v2181 = vpop.f32.mrb[0].mxu0
    %2182 = vdwg.mxu0
    %v2183 = vadd.f32 %v2043, %v2153
    %v2184 = vadd.f32 %v2044, %v2156
    %v2185 = vadd.f32 %v2045, %v2161
    %v2186 = vadd.f32 %v2046, %v2164
    %v2187 = vadd.f32 %v2047, %v2169
    %v2188 = vadd.f32 %v2048, %v2172
    %v2189 = vadd.f32 %v2049, %v2177
    %v2190 = vadd.f32 %v2050, %v2180
    %v2191 = vld [vmem:[%s4] sm:$0x1]
    %v2193 = vlaneseq
    %v2194 = vshrl.u32 %v2193, 7
    %v2195 = vsub.s32 0, %v2194
    %v2196 = vrot.slane %v2191, %v2195
    %v2198 = vadd.f32 %v2183, %v2196
    %v2199 = vadd.f32 %v2184, %v2196
    %v2200 = vadd.f32 %v2185, %v2196
    %v2201 = vadd.f32 %v2186, %v2196
    %v2202 = vadd.f32 %v2187, %v2196
    %v2203 = vadd.f32 %v2188, %v2196
    %v2204 = vadd.f32 %v2189, %v2196
    %v2205 = vadd.f32 %v2190, %v2196
    %v2206 = vmax.f32 %v2198, 0.0
    %v2207 = vmax.f32 %v2199, 0.0
    %v2208 = vmax.f32 %v2200, 0.0
    %v2209 = vmax.f32 %v2201, 0.0
    %v2210 = vmax.f32 %v2202, 0.0
    %v2211 = vmax.f32 %v2203, 0.0
    %v2212 = vmax.f32 %v2204, 0.0
    %v2213 = vmax.f32 %v2205, 0.0
    %v2214 = vmax.f32 %v2206, %v2207
    %v2215 = vmax.f32 %v2208, %v2209
    %v2216 = vmax.f32 %v2210, %v2211
    %v2217 = vmax.f32 %v2212, %v2213
    %2222 = vrot.lane.b32.xlu0 %v2214, 64
    %v2223 = vpop.permute.xlu0 %2222
    %2224 = vrot.lane.b32.xlu0 %v2215, 64
    %v2225 = vpop.permute.xlu0 %2224
    %2226 = vrot.lane.b32.xlu0 %v2216, 64
    %v2227 = vpop.permute.xlu0 %2226
    %2228 = vrot.lane.b32.xlu0 %v2217, 64
    %v2229 = vpop.permute.xlu0 %2228
    %v2234 = vmax.f32 %v2214, %v2223
    %v2235 = vmax.f32 %v2215, %v2225
    %v2236 = vmax.f32 %v2216, %v2227
    %v2237 = vmax.f32 %v2217, %v2229
    %v2238 = vpack.c.bf16 %v2235, %v2234
    %v2239 = vpack.c.bf16 %v2237, %v2236
    %v2242 = vunpack.c.l.b16 %v2238
    %v2243 = vunpack.c.h.b16 %v2238
    %v2244 = vunpack.c.l.b16 %v2239
    %v2245 = vunpack.c.h.b16 %v2239
    %v2246 = vpack.c.b16 %v2242, %v2242
    %v2247 = vpack.c.b16 %v2243, %v2243
    %v2248 = vpack.c.b16 %v2244, %v2244
    %v2249 = vpack.c.b16 %v2245, %v2245
    %v2250 = vld [vmem:[%s6] sm:$0x1]
    %v2251 = vld [vmem:[#allocation2] sm:$0xf]
    %v2252 = vld [vmem:[#allocation2 + $0x4] sm:$0xf]
    %v2253 = vld [vmem:[#allocation2 + $0x8] sm:$0xf]
    %v2254 = vld [vmem:[#allocation2 + $0xc] sm:$0xf]
    %v2255 = vld [vmem:[#allocation2 + $0x10] sm:$0xf]
    %v2256 = vld [vmem:[#allocation2 + $0x14] sm:$0xf]
    %v2257 = vld [vmem:[#allocation2 + $0x18] sm:$0xf]
    %v2258 = vld [vmem:[#allocation2 + $0x1c] sm:$0xf]
    %v2267 = vunpack.c.l.b16 %v2251
    %v2268 = vunpack.c.l.b16 %v2252
    %v2269 = vunpack.c.l.b16 %v2253
    %v2270 = vunpack.c.l.b16 %v2254
    %v2271 = vunpack.c.l.b16 %v2255
    %v2272 = vunpack.c.l.b16 %v2256
    %v2273 = vunpack.c.l.b16 %v2257
    %v2274 = vunpack.c.l.b16 %v2258
    %v2275 = vpack.c.b16 %v2268, %v2267
    %v2276 = vpack.c.b16 %v2270, %v2269
    %v2277 = vpack.c.b16 %v2272, %v2271
    %v2278 = vpack.c.b16 %v2274, %v2273
    %vm2283 = vcmask 523264
    %v2285 = vsel %vm2283, %v2246, 0
    %2287 = vmatprep.subr.bf16.mxu0 0
    %2288 = vmatpush1.bf16.msra.mxu0 %v2275
    %2289 = vmatprep.subr.bf16.mxu0 0
    %2290 = vmatpush1.bf16.msra.mxu0 %v2276
    %2291 = vmatprep.subr.bf16.mxu0 0
    %2292 = vmatpush1.bf16.msra.mxu0 %v2277
    %2293 = vmatprep.subr.bf16.mxu0 0
    %2294 = vmatpush1.bf16.msra.mxu0 %v2278
    %2295 = vmatprep.subr.bf16.mxu0 0
    %2296 = vmatpush1.bf16.msra.mxu0 0
    %2297 = vmatprep.subr.bf16.mxu0 0
    %2298 = vmatpush1.bf16.msra.mxu0 0
    %2299 = vmatprep.subr.bf16.mxu0 0
    %2300 = vmatpush1.bf16.msra.mxu0 0
    %2301 = vmatprep.subr.bf16.mxu0 0
    %2302 = vmatpush1.bf16.msra.mxu0 0
    %2303 = vmatprep.subr.bf16.mxu0 0
    %2304 = vmatpush1.bf16.msra.mxu0 0
    %2305 = vmatprep.subr.bf16.mxu0 0
    %2306 = vmatpush1.bf16.msra.mxu0 0
    %2307 = vmatprep.subr.bf16.mxu0 0
    %2308 = vmatpush1.bf16.msra.mxu0 0
    %2309 = vmatprep.subr.bf16.mxu0 0
    %2310 = vmatpush1.bf16.msra.mxu0 0
    %2311 = vmatprep.subr.bf16.mxu0 0
    %2312 = vmatpush1.bf16.msra.mxu0 0
    %2313 = vmatprep.subr.bf16.mxu0 0
    %2314 = vmatpush1.bf16.msra.mxu0 0
    %2315 = vmatprep.subr.bf16.mxu0 0
    %2316 = vmatpush1.bf16.msra.mxu0 0
    %2317 = vmatprep.subr.bf16.mxu0 0
    %2318 = vmatpush1.bf16.msra.mxu0 0
    %2319 = vmatprep.mubr.bf16.mxu0 0
    %2320 = vmatmul.mubr.bf16.gmra.mrb[0].mxu0 %v2285
    %v2321 = vpop.f32.mrb[0].mxu0
    %v2322 = vadd.f32 0.0, %v2321
    %v2323 = vpop.f32.mrb[0].mxu0
    %v2324 = vpop.f32.mrb[0].mxu0
    %v2325 = vpop.f32.mrb[0].mxu0
    %2326 = vdwg.mxu0
    %v2328 = vlaneseq
    %v2329 = vshrl.u32 %v2328, 7
    %v2330 = vsub.s32 0, %v2329
    %v2331 = vrot.slane %v2250, %v2330
    %v2333 = vadd.f32 %v2331, %v2322
    %s2334 = scalar_lea.vmem [#allocation2], 32
    %v2335 = vld [vmem:[%s2334] sm:$0xf]
    %v2336 = vld [vmem:[%s2334 + $0x4] sm:$0xf]
    %v2337 = vld [vmem:[%s2334 + $0x8] sm:$0xf]
    %v2338 = vld [vmem:[%s2334 + $0xc] sm:$0xf]
    %v2339 = vld [vmem:[%s2334 + $0x10] sm:$0xf]
    %v2340 = vld [vmem:[%s2334 + $0x14] sm:$0xf]
    %v2341 = vld [vmem:[%s2334 + $0x18] sm:$0xf]
    %v2342 = vld [vmem:[%s2334 + $0x1c] sm:$0xf]
    %v2351 = vunpack.c.l.b16 %v2335
    %v2352 = vunpack.c.l.b16 %v2336
    %v2353 = vunpack.c.l.b16 %v2337
    %v2354 = vunpack.c.l.b16 %v2338
    %v2355 = vunpack.c.l.b16 %v2339
    %v2356 = vunpack.c.l.b16 %v2340
    %v2357 = vunpack.c.l.b16 %v2341
    %v2358 = vunpack.c.l.b16 %v2342
    %v2359 = vpack.c.b16 %v2352, %v2351
    %v2360 = vpack.c.b16 %v2354, %v2353
    %v2361 = vpack.c.b16 %v2356, %v2355
    %v2362 = vpack.c.b16 %v2358, %v2357
    %v2368 = vsel %vm2283, %v2247, 0
    %2370 = vmatprep.subr.bf16.mxu0 0
    %2371 = vmatpush1.bf16.msra.mxu0 %v2359
    %2372 = vmatprep.subr.bf16.mxu0 0
    %2373 = vmatpush1.bf16.msra.mxu0 %v2360
    %2374 = vmatprep.subr.bf16.mxu0 0
    %2375 = vmatpush1.bf16.msra.mxu0 %v2361
    %2376 = vmatprep.subr.bf16.mxu0 0
    %2377 = vmatpush1.bf16.msra.mxu0 %v2362
    %2378 = vmatprep.subr.bf16.mxu0 0
    %2379 = vmatpush1.bf16.msra.mxu0 0
    %2380 = vmatprep.subr.bf16.mxu0 0
    %2381 = vmatpush1.bf16.msra.mxu0 0
    %2382 = vmatprep.subr.bf16.mxu0 0
    %2383 = vmatpush1.bf16.msra.mxu0 0
    %2384 = vmatprep.subr.bf16.mxu0 0
    %2385 = vmatpush1.bf16.msra.mxu0 0
    %2386 = vmatprep.subr.bf16.mxu0 0
    %2387 = vmatpush1.bf16.msra.mxu0 0
    %2388 = vmatprep.subr.bf16.mxu0 0
    %2389 = vmatpush1.bf16.msra.mxu0 0
    %2390 = vmatprep.subr.bf16.mxu0 0
    %2391 = vmatpush1.bf16.msra.mxu0 0
    %2392 = vmatprep.subr.bf16.mxu0 0
    %2393 = vmatpush1.bf16.msra.mxu0 0
    %2394 = vmatprep.subr.bf16.mxu0 0
    %2395 = vmatpush1.bf16.msra.mxu0 0
    %2396 = vmatprep.subr.bf16.mxu0 0
    %2397 = vmatpush1.bf16.msra.mxu0 0
    %2398 = vmatprep.subr.bf16.mxu0 0
    %2399 = vmatpush1.bf16.msra.mxu0 0
    %2400 = vmatprep.subr.bf16.mxu0 0
    %2401 = vmatpush1.bf16.msra.mxu0 0
    %2402 = vmatprep.mubr.bf16.mxu0 0
    %2403 = vmatmul.mubr.bf16.gmra.mrb[0].mxu0 %v2368
    %v2404 = vpop.f32.mrb[0].mxu0
    %v2405 = vadd.f32 0.0, %v2404
    %v2406 = vpop.f32.mrb[0].mxu0
    %v2407 = vpop.f32.mrb[0].mxu0
    %v2408 = vpop.f32.mrb[0].mxu0
    %2409 = vdwg.mxu0
    %v2410 = vadd.f32 %v2333, %v2405
    %s2411 = scalar_lea.vmem [#allocation2], 64
    %v2412 = vld [vmem:[%s2411] sm:$0xf]
    %v2413 = vld [vmem:[%s2411 + $0x4] sm:$0xf]
    %v2414 = vld [vmem:[%s2411 + $0x8] sm:$0xf]
    %v2415 = vld [vmem:[%s2411 + $0xc] sm:$0xf]
    %v2416 = vld [vmem:[%s2411 + $0x10] sm:$0xf]
    %v2417 = vld [vmem:[%s2411 + $0x14] sm:$0xf]
    %v2418 = vld [vmem:[%s2411 + $0x18] sm:$0xf]
    %v2419 = vld [vmem:[%s2411 + $0x1c] sm:$0xf]
    %v2428 = vunpack.c.l.b16 %v2412
    %v2429 = vunpack.c.l.b16 %v2413
    %v2430 = vunpack.c.l.b16 %v2414
    %v2431 = vunpack.c.l.b16 %v2415
    %v2432 = vunpack.c.l.b16 %v2416
    %v2433 = vunpack.c.l.b16 %v2417
    %v2434 = vunpack.c.l.b16 %v2418
    %v2435 = vunpack.c.l.b16 %v2419
    %v2436 = vpack.c.b16 %v2429, %v2428
    %v2437 = vpack.c.b16 %v2431, %v2430
    %v2438 = vpack.c.b16 %v2433, %v2432
    %v2439 = vpack.c.b16 %v2435, %v2434
    %v2445 = vsel %vm2283, %v2248, 0
    %2447 = vmatprep.subr.bf16.mxu0 0
    %2448 = vmatpush1.bf16.msra.mxu0 %v2436
    %2449 = vmatprep.subr.bf16.mxu0 0
    %2450 = vmatpush1.bf16.msra.mxu0 %v2437
    %2451 = vmatprep.subr.bf16.mxu0 0
    %2452 = vmatpush1.bf16.msra.mxu0 %v2438
    %2453 = vmatprep.subr.bf16.mxu0 0
    %2454 = vmatpush1.bf16.msra.mxu0 %v2439
    %2455 = vmatprep.subr.bf16.mxu0 0
    %2456 = vmatpush1.bf16.msra.mxu0 0
    %2457 = vmatprep.subr.bf16.mxu0 0
    %2458 = vmatpush1.bf16.msra.mxu0 0
    %2459 = vmatprep.subr.bf16.mxu0 0
    %2460 = vmatpush1.bf16.msra.mxu0 0
    %2461 = vmatprep.subr.bf16.mxu0 0
    %2462 = vmatpush1.bf16.msra.mxu0 0
    %2463 = vmatprep.subr.bf16.mxu0 0
    %2464 = vmatpush1.bf16.msra.mxu0 0
    %2465 = vmatprep.subr.bf16.mxu0 0
    %2466 = vmatpush1.bf16.msra.mxu0 0
    %2467 = vmatprep.subr.bf16.mxu0 0
    %2468 = vmatpush1.bf16.msra.mxu0 0
    %2469 = vmatprep.subr.bf16.mxu0 0
    %2470 = vmatpush1.bf16.msra.mxu0 0
    %2471 = vmatprep.subr.bf16.mxu0 0
    %2472 = vmatpush1.bf16.msra.mxu0 0
    %2473 = vmatprep.subr.bf16.mxu0 0
    %2474 = vmatpush1.bf16.msra.mxu0 0
    %2475 = vmatprep.subr.bf16.mxu0 0
    %2476 = vmatpush1.bf16.msra.mxu0 0
    %2477 = vmatprep.subr.bf16.mxu0 0
    %2478 = vmatpush1.bf16.msra.mxu0 0
    %2479 = vmatprep.mubr.bf16.mxu0 0
    %2480 = vmatmul.mubr.bf16.gmra.mrb[0].mxu0 %v2445
    %v2481 = vpop.f32.mrb[0].mxu0
    %v2482 = vadd.f32 0.0, %v2481
    %v2483 = vpop.f32.mrb[0].mxu0
    %v2484 = vpop.f32.mrb[0].mxu0
    %v2485 = vpop.f32.mrb[0].mxu0
    %2486 = vdwg.mxu0
    %v2487 = vadd.f32 %v2410, %v2482
    %s2488 = scalar_lea.vmem [#allocation2], 96
    %v2489 = vld [vmem:[%s2488] sm:$0xf]
    %v2490 = vld [vmem:[%s2488 + $0x4] sm:$0xf]
    %v2491 = vld [vmem:[%s2488 + $0x8] sm:$0xf]
    %v2492 = vld [vmem:[%s2488 + $0xc] sm:$0xf]
    %v2493 = vld [vmem:[%s2488 + $0x10] sm:$0xf]
    %v2494 = vld [vmem:[%s2488 + $0x14] sm:$0xf]
    %v2495 = vld [vmem:[%s2488 + $0x18] sm:$0xf]
    %v2496 = vld [vmem:[%s2488 + $0x1c] sm:$0xf]
    %v2505 = vunpack.c.l.b16 %v2489
    %v2506 = vunpack.c.l.b16 %v2490
    %v2507 = vunpack.c.l.b16 %v2491
    %v2508 = vunpack.c.l.b16 %v2492
    %v2509 = vunpack.c.l.b16 %v2493
    %v2510 = vunpack.c.l.b16 %v2494
    %v2511 = vunpack.c.l.b16 %v2495
    %v2512 = vunpack.c.l.b16 %v2496
    %v2513 = vpack.c.b16 %v2506, %v2505
    %v2514 = vpack.c.b16 %v2508, %v2507
    %v2515 = vpack.c.b16 %v2510, %v2509
    %v2516 = vpack.c.b16 %v2512, %v2511
    %v2522 = vsel %vm2283, %v2249, 0
    %2524 = vmatprep.subr.bf16.mxu0 0
    %2525 = vmatpush1.bf16.msra.mxu0 %v2513
    %2526 = vmatprep.subr.bf16.mxu0 0
    %2527 = vmatpush1.bf16.msra.mxu0 %v2514
    %2528 = vmatprep.subr.bf16.mxu0 0
    %2529 = vmatpush1.bf16.msra.mxu0 %v2515
    %2530 = vmatprep.subr.bf16.mxu0 0
    %2531 = vmatpush1.bf16.msra.mxu0 %v2516
    %2532 = vmatprep.subr.bf16.mxu0 0
    %2533 = vmatpush1.bf16.msra.mxu0 0
    %2534 = vmatprep.subr.bf16.mxu0 0
    %2535 = vmatpush1.bf16.msra.mxu0 0
    %2536 = vmatprep.subr.bf16.mxu0 0
    %2537 = vmatpush1.bf16.msra.mxu0 0
    %2538 = vmatprep.subr.bf16.mxu0 0
    %2539 = vmatpush1.bf16.msra.mxu0 0
    %2540 = vmatprep.subr.bf16.mxu0 0
    %2541 = vmatpush1.bf16.msra.mxu0 0
    %2542 = vmatprep.subr.bf16.mxu0 0
    %2543 = vmatpush1.bf16.msra.mxu0 0
    %2544 = vmatprep.subr.bf16.mxu0 0
    %2545 = vmatpush1.bf16.msra.mxu0 0
    %2546 = vmatprep.subr.bf16.mxu0 0
    %2547 = vmatpush1.bf16.msra.mxu0 0
    %2548 = vmatprep.subr.bf16.mxu0 0
    %2549 = vmatpush1.bf16.msra.mxu0 0
    %2550 = vmatprep.subr.bf16.mxu0 0
    %2551 = vmatpush1.bf16.msra.mxu0 0
    %2552 = vmatprep.subr.bf16.mxu0 0
    %2553 = vmatpush1.bf16.msra.mxu0 0
    %2554 = vmatprep.subr.bf16.mxu0 0
    %2555 = vmatpush1.bf16.msra.mxu0 0
    %2556 = vmatprep.mubr.bf16.mxu0 0
    %2557 = vmatmul.mubr.bf16.gmra.mrb[0].mxu0 %v2522
    %v2558 = vpop.f32.mrb[0].mxu0
    %v2559 = vadd.f32 0.0, %v2558
    %v2560 = vpop.f32.mrb[0].mxu0
    %v2561 = vpop.f32.mrb[0].mxu0
    %v2562 = vpop.f32.mrb[0].mxu0
    %2563 = vdwg.mxu0
    %v2564 = vadd.f32 %v2487, %v2559
    %v2565 = vmax.f32 %v2564, 0.0
    %v2566 = vpack.c.bf16 %v2565, %v2565
    %v2567 = vld [vmem:[%s7] sm:$0xf]
    %v2568 = vld [vmem:[%s7 + $0x4] sm:$0xf]
    %v2569 = vld [vmem:[%s7 + $0x8] sm:$0xf]
    %v2570 = vld [vmem:[%s7 + $0xc] sm:$0xf]
    %v2571 = vld [vmem:[%s7 + $0x10] sm:$0xf]
    %v2572 = vld [vmem:[%s7 + $0x14] sm:$0xf]
    %v2573 = vld [vmem:[%s7 + $0x18] sm:$0xf]
    %v2574 = vld [vmem:[%s7 + $0x1c] sm:$0xf]
    %v2575 = vld [vmem:[%s7 + $0x20] sm:$0xf]
    %v2576 = vld [vmem:[%s7 + $0x24] sm:$0xf]
    %v2577 = vld [vmem:[%s7 + $0x28] sm:$0xf]
    %v2578 = vld [vmem:[%s7 + $0x2c] sm:$0xf]
    %v2579 = vld [vmem:[%s7 + $0x30] sm:$0xf]
    %v2580 = vld [vmem:[%s7 + $0x34] sm:$0xf]
    %v2581 = vld [vmem:[%s7 + $0x38] sm:$0xf]
    %v2582 = vld [vmem:[%s8] sm:$0x1]
    %v2584 = vlaneseq
    %v2585 = vshrl.u32 %v2584, 7
    %v2586 = vsub.s32 0, %v2585
    %v2587 = vrot.slane %v2582, %v2586
    %v2604 = vunpack.c.l.b16 %v2567
    %v2605 = vunpack.c.l.b16 %v2568
    %v2606 = vunpack.c.l.b16 %v2569
    %v2607 = vunpack.c.l.b16 %v2570
    %v2608 = vunpack.c.l.b16 %v2571
    %v2609 = vunpack.c.l.b16 %v2572
    %v2610 = vunpack.c.l.b16 %v2573
    %v2611 = vunpack.c.l.b16 %v2574
    %v2612 = vunpack.c.l.b16 %v2575
    %v2613 = vunpack.c.l.b16 %v2576
    %v2614 = vunpack.c.l.b16 %v2577
    %v2615 = vunpack.c.l.b16 %v2578
    %v2616 = vunpack.c.l.b16 %v2579
    %v2617 = vunpack.c.l.b16 %v2580
    %v2618 = vunpack.c.l.b16 %v2581
    %v2619 = vpack.c.b16 %v2605, %v2604
    %v2620 = vpack.c.b16 %v2607, %v2606
    %v2621 = vpack.c.b16 %v2609, %v2608
    %v2622 = vpack.c.b16 %v2611, %v2610
    %v2623 = vpack.c.b16 %v2613, %v2612
    %v2624 = vpack.c.b16 %v2615, %v2614
    %v2625 = vpack.c.b16 %v2617, %v2616
    %v2626 = vpack.c.b16 %v2618, %v2618
    %vm2634 = vcmask 982016
    %v2636 = vsel %vm2634, %v2566, 0
    %vm2638 = vcmask 1043456
    %v2640 = vsel %vm2638, %v2626, 0
    %2642 = vmatprep.subr.bf16.mxu0 0
    %2643 = vmatpush1.bf16.msra.mxu0 %v2619
    %2644 = vmatprep.subr.bf16.mxu0 0
    %2645 = vmatpush1.bf16.msra.mxu0 %v2620
    %2646 = vmatprep.subr.bf16.mxu0 0
    %2647 = vmatpush1.bf16.msra.mxu0 %v2621
    %2648 = vmatprep.subr.bf16.mxu0 0
    %2649 = vmatpush1.bf16.msra.mxu0 %v2622
    %2650 = vmatprep.subr.bf16.mxu0 0
    %2651 = vmatpush1.bf16.msra.mxu0 %v2623
    %2652 = vmatprep.subr.bf16.mxu0 0
    %2653 = vmatpush1.bf16.msra.mxu0 %v2624
    %2654 = vmatprep.subr.bf16.mxu0 0
    %2655 = vmatpush1.bf16.msra.mxu0 %v2625
    %2656 = vmatprep.subr.bf16.mxu0 0
    %2657 = vmatpush1.bf16.msra.mxu0 %v2640
    %2658 = vmatprep.subr.bf16.mxu0 0
    %2659 = vmatpush1.bf16.msra.mxu0 0
    %2660 = vmatprep.subr.bf16.mxu0 0
    %2661 = vmatpush1.bf16.msra.mxu0 0
    %2662 = vmatprep.subr.bf16.mxu0 0
    %2663 = vmatpush1.bf16.msra.mxu0 0
    %2664 = vmatprep.subr.bf16.mxu0 0
    %2665 = vmatpush1.bf16.msra.mxu0 0
    %2666 = vmatprep.subr.bf16.mxu0 0
    %2667 = vmatpush1.bf16.msra.mxu0 0
    %2668 = vmatprep.subr.bf16.mxu0 0
    %2669 = vmatpush1.bf16.msra.mxu0 0
    %2670 = vmatprep.subr.bf16.mxu0 0
    %2671 = vmatpush1.bf16.msra.mxu0 0
    %2672 = vmatprep.subr.bf16.mxu0 0
    %2673 = vmatpush1.bf16.msra.mxu0 0
    %2674 = vmatprep.mubr.bf16.mxu0 0
    %2675 = vmatmul.mubr.bf16.gmra.mrb[0].mxu0 %v2636
    %v2676 = vpop.f32.mrb[0].mxu0
    %v2677 = vadd.f32 %v2587, %v2676
    %v2678 = vpop.f32.mrb[0].mxu0
    %v2679 = vpop.f32.mrb[0].mxu0
    %v2680 = vpop.f32.mrb[0].mxu0
    %2681 = vdwg.mxu0
    %v2682 = vmax.f32 %v2677, 0.0
    %v2683 = vpack.c.bf16 %v2682, %v2682
    %v2684 = vld [vmem:[%s9] sm:$0xf]
    %v2685 = vld [vmem:[%s9 + $0x4] sm:$0xf]
    %v2686 = vld [vmem:[%s9 + $0x8] sm:$0xf]
    %v2687 = vld [vmem:[%s9 + $0xc] sm:$0xf]
    %v2688 = vld [vmem:[%s9 + $0x10] sm:$0xf]
    %v2689 = vld [vmem:[%s9 + $0x14] sm:$0xf]
    %v2690 = vld [vmem:[%s9 + $0x18] sm:$0xf]
    %v2691 = vld [vmem:[%s9 + $0x1c] sm:$0xf]
    %v2692 = vld [vmem:[%s9 + $0x20] sm:$0xf]
    %v2693 = vld [vmem:[%s9 + $0x24] sm:$0xf]
    %v2694 = vld [vmem:[%s9 + $0x28] sm:$0x3]
    %v2695 = vld [vmem:[%s10] sm:$0x1]
    %v2697 = vlaneseq
    %v2698 = vshrl.u32 %v2697, 7
    %v2699 = vsub.s32 0, %v2698
    %v2700 = vrot.slane %v2695, %v2699
    %v2713 = vunpack.c.l.b16 %v2684
    %v2714 = vunpack.c.l.b16 %v2685
    %v2715 = vunpack.c.l.b16 %v2686
    %v2716 = vunpack.c.l.b16 %v2687
    %v2717 = vunpack.c.l.b16 %v2688
    %v2718 = vunpack.c.l.b16 %v2689
    %v2719 = vunpack.c.l.b16 %v2690
    %v2720 = vunpack.c.l.b16 %v2691
    %v2721 = vunpack.c.l.b16 %v2692
    %v2722 = vunpack.c.l.b16 %v2693
    %v2723 = vunpack.c.l.b16 %v2694
    %v2724 = vpack.c.b16 %v2714, %v2713
    %v2725 = vpack.c.b16 %v2716, %v2715
    %v2726 = vpack.c.b16 %v2718, %v2717
    %v2727 = vpack.c.b16 %v2720, %v2719
    %v2728 = vpack.c.b16 %v2722, %v2721
    %v2729 = vpack.c.b16 %v2723, %v2723
    %vm2735 = vcmask 687104
    %v2737 = vsel %vm2735, %v2683, 0
    %vm2739 = vcmask 1041408
    %v2741 = vsel %vm2739, %v2729, 0
    %2743 = vmatprep.subr.bf16.mxu0 0
    %2744 = vmatpush1.bf16.msra.mxu0 %v2724
    %2745 = vmatprep.subr.bf16.mxu0 0
    %2746 = vmatpush1.bf16.msra.mxu0 %v2725
    %2747 = vmatprep.subr.bf16.mxu0 0
    %2748 = vmatpush1.bf16.msra.mxu0 %v2726
    %2749 = vmatprep.subr.bf16.mxu0 0
    %2750 = vmatpush1.bf16.msra.mxu0 %v2727
    %2751 = vmatprep.subr.bf16.mxu0 0
    %2752 = vmatpush1.bf16.msra.mxu0 %v2728
    %2753 = vmatprep.subr.bf16.mxu0 0
    %2754 = vmatpush1.bf16.msra.mxu0 %v2741
    %2755 = vmatprep.subr.bf16.mxu0 0
    %2756 = vmatpush1.bf16.msra.mxu0 0
    %2757 = vmatprep.subr.bf16.mxu0 0
    %2758 = vmatpush1.bf16.msra.mxu0 0
    %2759 = vmatprep.subr.bf16.mxu0 0
    %2760 = vmatpush1.bf16.msra.mxu0 0
    %2761 = vmatprep.subr.bf16.mxu0 0
    %2762 = vmatpush1.bf16.msra.mxu0 0
    %2763 = vmatprep.subr.bf16.mxu0 0
    %2764 = vmatpush1.bf16.msra.mxu0 0
    %2765 = vmatprep.subr.bf16.mxu0 0
    %2766 = vmatpush1.bf16.msra.mxu0 0
    %2767 = vmatprep.subr.bf16.mxu0 0
    %2768 = vmatpush1.bf16.msra.mxu0 0
    %2769 = vmatprep.subr.bf16.mxu0 0
    %2770 = vmatpush1.bf16.msra.mxu0 0
    %2771 = vmatprep.subr.bf16.mxu0 0
    %2772 = vmatpush1.bf16.msra.mxu0 0
    %2773 = vmatprep.subr.bf16.mxu0 0
    %2774 = vmatpush1.bf16.msra.mxu0 0
    %2775 = vmatprep.mubr.bf16.mxu0 0
    %2776 = vmatmul.mubr.bf16.gmra.mrb[0].mxu0 %v2737
    %v2777 = vpop.f32.mrb[0].mxu0
    %v2778 = vadd.f32 %v2700, %v2777
    %v2779 = vpop.f32.mrb[0].mxu0
    %v2780 = vpop.f32.mrb[0].mxu0
    %v2781 = vpop.f32.mrb[0].mxu0
    %2782 = vdwg.mxu0
    %2783 = vst.msk [vmem:[%s11] sm:$0xff] %vm2283, %v2778
    // Predicated region
    $region50: #{cnn_forward.1} parent=1 // pred_check
      _
    $region51: #{cnn_forward.1} parent=1 // pred_check_branch
      %2785 = sbr.rel (0) target = $region53
    $region52: #{cnn_forward.1} parent=1 // pred_region
      _
    $region53: #{cnn_forward.1} parent=1 // pred_fallthru
      _
    // Predicated region
    $region54: #{cnn_forward.1} parent=1 // pred_check
      _
    $region55: #{cnn_forward.1} parent=1 // pred_check_branch
      %2787 = sbr.rel (0) target = $region57
    $region56: #{cnn_forward.1} parent=1 // pred_region
      _
    $region57: #{cnn_forward.1} parent=1 // pred_fallthru
      _
    %2788 = vsyncpa [#allocation3], 1

</llo_original>
